<compile_context>
chip_gen: v5e
topology: v5e:2x2
jax: 0.10.0
libtpu: 0.0.40
codegen_flags: <defaults>
</compile_context>

<pallas_src>
import jax
import jax.numpy as jnp
from jax.experimental import pallas as pl
from jax.experimental.pallas import tpu as pltpu


def flatlstm_kernel(tok_ref, seg_ref, emb_ref, wih1_ref, b1_ref, wih2_ref,
                    b2_ref, wp1_ref, bp1_ref, wp2_ref, bp2_ref, wout_ref,
                    bout_ref, out_ref):
    N = tok_ref.shape[0]           # BT * L token rows in this grid step
    V = emb_ref.shape[0]
    H = wih2_ref.shape[0]          # wih2_t is [H, 4H]

    # --- Embedding gather as one-hot matmul (MXU friendly at small vocab) ---
    # TODO(synk): for large vocab switch to a scalar-prefetch / DMA row gather
    # instead of materializing an [N, V] one-hot.
    onehot = (jax.lax.broadcasted_iota(jnp.int32, (N, V), 1)
              == tok_ref[...]).astype(jnp.float32)                        # [N, V]
    x = jnp.dot(onehot, emb_ref[...], preferred_element_type=jnp.float32)  # [N, E]

    # --- Single-step LSTM layer (h0 = c0 = 0), PyTorch gate order i,f,g,o ---
    def lstm_step(inp, w_t_ref, b_ref):
        gates = jnp.dot(inp, w_t_ref[...],
                        preferred_element_type=jnp.float32) + b_ref[...]   # [N, 4H]
        i = jax.nn.sigmoid(gates[:, 0:H])
        # forget gate irrelevant: f * c0 == 0
        g = jnp.tanh(gates[:, 2 * H:3 * H])
        o = jax.nn.sigmoid(gates[:, 3 * H:4 * H])
        return o * jnp.tanh(i * g)

    h1 = lstm_step(x, wih1_ref, b1_ref)       # layer 1 -> [N, H]
    h2 = lstm_step(h1, wih2_ref, b2_ref)      # layer 2 -> [N, H]

    # --- SelfAttention energies: Linear -> ReLU -> (row . wp2) on the VPU ---
    e = jnp.maximum(
        jnp.dot(h2, wp1_ref[...], preferred_element_type=jnp.float32)
        + bp1_ref[...], 0.0)                                              # [N, 64]
    energy = (jnp.sum(e * wp2_ref[...], axis=-1, keepdims=True)
              + bp2_ref[...])                                             # [N, 1]

    # --- Per-tree softmax over L + weighted sum, via segment matmuls ---
    # A single global max is a valid per-tree constant shift, so the per-tree
    # softmax stays exact while avoiding any 3-D reshape.
    m = jnp.max(energy, axis=0, keepdims=True)                            # [1, 1]
    p = jnp.exp(energy - m)                                               # [N, 1]
    seg = seg_ref[...]                                                    # [BT, N]
    denom = jnp.dot(seg, p, preferred_element_type=jnp.float32)           # [BT, 1]
    num = jnp.dot(seg, h2 * p, preferred_element_type=jnp.float32)        # [BT, H]
    ctx = num / denom                                                     # [BT, H]

    # --- Output linear head ---
    out_ref[...] = (jnp.dot(ctx, wout_ref[...],
                            preferred_element_type=jnp.float32) + bout_ref[...])


def flatlstm_forward(tokens, p, *, block_trees=8):
    """tokens: [B, L] int32 of flattened-tree token ids -> [B, out_size]."""
    B, L = tokens.shape
    BT = block_trees
    Bp = ((B + BT - 1) // BT) * BT
    if Bp != B:                                    # pad batch to a BT multiple
        tokens = jnp.concatenate(
            [tokens, jnp.zeros((Bp - B, L), tokens.dtype)], axis=0)
    tok_flat = tokens.reshape(Bp * L, 1).astype(jnp.int32)
    N = BT * L

    # Block-diagonal segment matrix: seg[t, t*L + l] = 1 (per-tree pooling).
    seg = (jnp.arange(BT, dtype=jnp.int32)[:, None]
           == (jnp.arange(N, dtype=jnp.int32)[None, :] // L)).astype(jnp.float32)

    weights = (p["emb"], p["wih1_t"], p["b1"], p["wih2_t"], p["b2"],
               p["wp1_t"], p["bp1"], p["wp2_row"], p["bp2"],
               p["wout_t"], p["bout"])
    out_size = p["wout_t"].shape[1]

    # Constant block index across the grid -> weights fetched once, resident.
    resident = lambda a: pl.BlockSpec(a.shape, lambda b: (0, 0))

    out = pl.pallas_call(
        flatlstm_kernel,
        out_shape=jax.ShapeDtypeStruct((Bp, out_size), jnp.float32),
        grid=(Bp // BT,),
        in_specs=[pl.BlockSpec((N, 1), lambda b: (b, 0)),   # tokens tile
                  resident(seg)] + [resident(w) for w in weights],
        out_specs=pl.BlockSpec((BT, out_size), lambda b: (b, 0)),
        compiler_params=pltpu.CompilerParams(
            dimension_semantics=("parallel",)),
    )(tok_flat, seg, *weights)
    return out[:B]


def init_raw_params(key, vocab, in_size, hidden, out_size):
    ks = jax.random.split(key, 16)
    u = lambda k, shape, s=0.1: jax.random.uniform(k, shape, jnp.float32, -s, s)
    return {
        "emb":   u(ks[0], (vocab, in_size), 1.0),
        "w_ih1": u(ks[1], (4 * hidden, in_size)),
        "w_hh1": u(ks[2], (4 * hidden, hidden)),   # unused at runtime (h0 == 0)
        "b_ih1": u(ks[3], (4 * hidden,)),
        "b_hh1": u(ks[4], (4 * hidden,)),
        "w_ih2": u(ks[5], (4 * hidden, hidden)),
        "w_hh2": u(ks[6], (4 * hidden, hidden)),   # unused at runtime (h0 == 0)
        "b_ih2": u(ks[7], (4 * hidden,)),
        "b_hh2": u(ks[8], (4 * hidden,)),
        "wp1":   u(ks[9], (64, hidden)),
        "bp1":   u(ks[10], (64,)),
        "wp2":   u(ks[11], (1, 64)),
        "bp2":   u(ks[12], (1,)),
        "wout":  u(ks[13], (out_size, hidden)),
        "bout":  u(ks[14], (out_size,)),
    }


def pack_kernel_params(raw):
    # Pre-transpose weights so in-kernel matmuls are x @ W; fold b_ih + b_hh.
    # wp2 stays as a [1, 64] row so the energy is a VPU mul + lane reduction.
    return {
        "emb":     raw["emb"],
        "wih1_t":  raw["w_ih1"].T,
        "b1":      (raw["b_ih1"] + raw["b_hh1"])[None, :],
        "wih2_t":  raw["w_ih2"].T,
        "b2":      (raw["b_ih2"] + raw["b_hh2"])[None, :],
        "wp1_t":   raw["wp1"].T,
        "bp1":     raw["bp1"][None, :],
        "wp2_row": raw["wp2"],
        "bp2":     raw["bp2"][None, :],
        "wout_t":  raw["wout"].T,
        "bout":    raw["bout"][None, :],
    }


def reference_forward(tokens, raw):
    """Pure-JAX mirror of the PyTorch forward for one flattened tree [L]."""
    x = raw["emb"][tokens]                                   # [L, E]

    def step(inp, w_ih, b_ih, b_hh):
        gates = inp @ w_ih.T + b_ih + b_hh
        i, f, g, o = jnp.split(gates, 4, axis=1)
        c = jax.nn.sigmoid(i) * jnp.tanh(g)                  # f * c0 == 0
        return jax.nn.sigmoid(o) * jnp.tanh(c)

    h1 = step(x, raw["w_ih1"], raw["b_ih1"], raw["b_hh1"])
    h2 = step(h1, raw["w_ih2"], raw["b_ih2"], raw["b_hh2"])
    energy = jnp.maximum(h2 @ raw["wp1"].T + raw["bp1"], 0.0) @ raw["wp2"].T + raw["bp2"]
    w = jax.nn.softmax(energy[:, 0], axis=0)
    ctx = (h2 * w[:, None]).sum(axis=0)                      # [H]
    return ctx @ raw["wout"].T + raw["bout"]                 # [out_size]


if __name__ == "__main__":
    vocab, in_size, hidden, out_size = 32, 16, 32, 8
    seq_len = 8        # flattened (post-order) tree length
    batch = 16         # number of flattened trees processed in one pallas_call

    key = jax.random.PRNGKey(0)
    k_tok, k_par = jax.random.split(key)
    tokens = jax.random.randint(k_tok, (batch, seq_len), 0, vocab, dtype=jnp.int32)

    raw = init_raw_params(k_par, vocab, in_size, hidden, out_size)
    params = pack_kernel_params(raw)

    out = jax.block_until_ready(flatlstm_forward(tokens, params, block_trees=8))
    ref = jax.block_until_ready(
        jax.vmap(reference_forward, in_axes=(0, None))(tokens, raw))

    assert out.shape == (batch, out_size)
    assert jnp.allclose(out, ref, rtol=1e-4, atol=1e-4), (out, ref)
    print("KERNEL_OK")
</pallas_src>

<mosaic_0001>
module attributes {stable_mosaic.version = 11 : i64} {
  func.func @flatlstm_kernel(%arg0: i32, %arg1: memref<64x1xi32, #tpu.memory_space<vmem>>, %arg2: memref<8x64xf32, #tpu.memory_space<vmem>>, %arg3: memref<32x16xf32, #tpu.memory_space<vmem>>, %arg4: memref<16x128xf32, #tpu.memory_space<vmem>>, %arg5: memref<1x128xf32, #tpu.memory_space<vmem>>, %arg6: memref<32x128xf32, #tpu.memory_space<vmem>>, %arg7: memref<1x128xf32, #tpu.memory_space<vmem>>, %arg8: memref<32x64xf32, #tpu.memory_space<vmem>>, %arg9: memref<1x64xf32, #tpu.memory_space<vmem>>, %arg10: memref<1x64xf32, #tpu.memory_space<vmem>>, %arg11: memref<1x1xf32, #tpu.memory_space<vmem>>, %arg12: memref<32x8xf32, #tpu.memory_space<vmem>>, %arg13: memref<1x8xf32, #tpu.memory_space<vmem>>, %arg14: memref<8x8xf32, #tpu.memory_space<vmem>>) attributes {dimension_semantics = [#tpu.dimension_semantics<parallel>], iteration_bounds = array<i64: 2>, scalar_prefetch = 0 : i64, scratch_operands = 0 : i64, tpu.core_type = #tpu.core_type<tc>, window_params = [{transform_indices = @transform_0, window_bounds = array<i64: 64, 1>}, {pipeline_mode = #tpu.pipeline_mode<synchronous>, transform_indices = @transform_1, window_bounds = array<i64: 8, 64>}, {pipeline_mode = #tpu.pipeline_mode<synchronous>, transform_indices = @transform_2, window_bounds = array<i64: 32, 16>}, {pipeline_mode = #tpu.pipeline_mode<synchronous>, transform_indices = @transform_3, window_bounds = array<i64: 16, 128>}, {pipeline_mode = #tpu.pipeline_mode<synchronous>, transform_indices = @transform_4, window_bounds = array<i64: 1, 128>}, {pipeline_mode = #tpu.pipeline_mode<synchronous>, transform_indices = @transform_5, window_bounds = array<i64: 32, 128>}, {pipeline_mode = #tpu.pipeline_mode<synchronous>, transform_indices = @transform_6, window_bounds = array<i64: 1, 128>}, {pipeline_mode = #tpu.pipeline_mode<synchronous>, transform_indices = @transform_7, window_bounds = array<i64: 32, 64>}, {pipeline_mode = #tpu.pipeline_mode<synchronous>, transform_indices = @transform_8, window_bounds = array<i64: 1, 64>}, {pipeline_mode = #tpu.pipeline_mode<synchronous>, transform_indices = @transform_9, window_bounds = array<i64: 1, 64>}, {pipeline_mode = #tpu.pipeline_mode<synchronous>, transform_indices = @transform_10, window_bounds = array<i64: 1, 1>}, {pipeline_mode = #tpu.pipeline_mode<synchronous>, transform_indices = @transform_11, window_bounds = array<i64: 32, 8>}, {pipeline_mode = #tpu.pipeline_mode<synchronous>, transform_indices = @transform_12, window_bounds = array<i64: 1, 8>}, {transform_indices = @transform_13, window_bounds = array<i64: 8, 8>}]} {
    %0 = tpu.iota {dimensions = array<i32: 1>} : vector<64x32xi32>
    %c0 = arith.constant 0 : index
    %c0_0 = arith.constant 0 : index
    %1 = vector.load %arg1[%c0, %c0_0] : memref<64x1xi32, #tpu.memory_space<vmem>>, vector<64x1xi32>
    %2 = vector.broadcast %1 : vector<64x1xi32> to vector<64x32xi32>
    %3 = arith.cmpi eq, %0, %2 : vector<64x32xi32>
    %4 = arith.extui %3 : vector<64x32xi1> to vector<64x32xi32>
    %5 = arith.sitofp %4 : vector<64x32xi32> to vector<64x32xf32>
    %c0_1 = arith.constant 0 : index
    %c0_2 = arith.constant 0 : index
    %6 = vector.load %arg3[%c0_1, %c0_2] : memref<32x16xf32, #tpu.memory_space<vmem>>, vector<32x16xf32>
    %cst = arith.constant dense<0.000000e+00> : vector<64x16xf32>
    %7 = tpu.matmul %5, %6, %cst {dimension_numbers = #tpu.dot_dimension_numbers<[1], [0], [0], [1], [0, 0, 1, 1], [], []>} : vector<64x32xf32>, vector<32x16xf32>, vector<64x16xf32> -> vector<64x16xf32>
    %c0_3 = arith.constant 0 : index
    %c0_4 = arith.constant 0 : index
    %8 = vector.load %arg4[%c0_3, %c0_4] : memref<16x128xf32, #tpu.memory_space<vmem>>, vector<16x128xf32>
    %cst_5 = arith.constant dense<0.000000e+00> : vector<64x128xf32>
    %9 = tpu.matmul %7, %8, %cst_5 {dimension_numbers = #tpu.dot_dimension_numbers<[1], [0], [0], [1], [0, 0, 1, 1], [], []>} : vector<64x16xf32>, vector<16x128xf32>, vector<64x128xf32> -> vector<64x128xf32>
    %c0_6 = arith.constant 0 : index
    %c0_7 = arith.constant 0 : index
    %10 = vector.load %arg5[%c0_6, %c0_7] : memref<1x128xf32, #tpu.memory_space<vmem>>, vector<1x128xf32>
    %11 = vector.broadcast %10 : vector<1x128xf32> to vector<64x128xf32>
    %12 = arith.addf %9, %11 : vector<64x128xf32>
    %13 = vector.extract_strided_slice %12 {offsets = [0, 0], sizes = [64, 32], strides = [1, 1]} : vector<64x128xf32> to vector<64x32xf32>
    %14 = arith.negf %13 : vector<64x32xf32>
    %15 = math.exp %14 : vector<64x32xf32>
    %cst_8 = arith.constant 1.000000e+00 : f32
    %16 = vector.broadcast %cst_8 : f32 to vector<64x32xf32>
    %17 = arith.addf %16, %15 : vector<64x32xf32>
    %18 = arith.divf %16, %17 : vector<64x32xf32>
    %19 = vector.extract_strided_slice %12 {offsets = [0, 64], sizes = [64, 32], strides = [1, 1]} : vector<64x128xf32> to vector<64x32xf32>
    %20 = math.tanh %19 : vector<64x32xf32>
    %21 = vector.extract_strided_slice %12 {offsets = [0, 96], sizes = [64, 32], strides = [1, 1]} : vector<64x128xf32> to vector<64x32xf32>
    %22 = arith.negf %21 : vector<64x32xf32>
    %23 = math.exp %22 : vector<64x32xf32>
    %cst_9 = arith.constant 1.000000e+00 : f32
    %24 = vector.broadcast %cst_9 : f32 to vector<64x32xf32>
    %25 = arith.addf %24, %23 : vector<64x32xf32>
    %26 = arith.divf %24, %25 : vector<64x32xf32>
    %27 = arith.mulf %18, %20 : vector<64x32xf32>
    %28 = math.tanh %27 : vector<64x32xf32>
    %29 = arith.mulf %26, %28 : vector<64x32xf32>
    %c0_10 = arith.constant 0 : index
    %c0_11 = arith.constant 0 : index
    %30 = vector.load %arg6[%c0_10, %c0_11] : memref<32x128xf32, #tpu.memory_space<vmem>>, vector<32x128xf32>
    %cst_12 = arith.constant dense<0.000000e+00> : vector<64x128xf32>
    %31 = tpu.matmul %29, %30, %cst_12 {dimension_numbers = #tpu.dot_dimension_numbers<[1], [0], [0], [1], [0, 0, 1, 1], [], []>} : vector<64x32xf32>, vector<32x128xf32>, vector<64x128xf32> -> vector<64x128xf32>
    %c0_13 = arith.constant 0 : index
    %c0_14 = arith.constant 0 : index
    %32 = vector.load %arg7[%c0_13, %c0_14] : memref<1x128xf32, #tpu.memory_space<vmem>>, vector<1x128xf32>
    %33 = vector.broadcast %32 : vector<1x128xf32> to vector<64x128xf32>
    %34 = arith.addf %31, %33 : vector<64x128xf32>
    %35 = vector.extract_strided_slice %34 {offsets = [0, 0], sizes = [64, 32], strides = [1, 1]} : vector<64x128xf32> to vector<64x32xf32>
    %36 = arith.negf %35 : vector<64x32xf32>
    %37 = math.exp %36 : vector<64x32xf32>
    %cst_15 = arith.constant 1.000000e+00 : f32
    %38 = vector.broadcast %cst_15 : f32 to vector<64x32xf32>
    %39 = arith.addf %38, %37 : vector<64x32xf32>
    %40 = arith.divf %38, %39 : vector<64x32xf32>
    %41 = vector.extract_strided_slice %34 {offsets = [0, 64], sizes = [64, 32], strides = [1, 1]} : vector<64x128xf32> to vector<64x32xf32>
    %42 = math.tanh %41 : vector<64x32xf32>
    %43 = vector.extract_strided_slice %34 {offsets = [0, 96], sizes = [64, 32], strides = [1, 1]} : vector<64x128xf32> to vector<64x32xf32>
    %44 = arith.negf %43 : vector<64x32xf32>
    %45 = math.exp %44 : vector<64x32xf32>
    %cst_16 = arith.constant 1.000000e+00 : f32
    %46 = vector.broadcast %cst_16 : f32 to vector<64x32xf32>
    %47 = arith.addf %46, %45 : vector<64x32xf32>
    %48 = arith.divf %46, %47 : vector<64x32xf32>
    %49 = arith.mulf %40, %42 : vector<64x32xf32>
    %50 = math.tanh %49 : vector<64x32xf32>
    %51 = arith.mulf %48, %50 : vector<64x32xf32>
    %c0_17 = arith.constant 0 : index
    %c0_18 = arith.constant 0 : index
    %52 = vector.load %arg8[%c0_17, %c0_18] : memref<32x64xf32, #tpu.memory_space<vmem>>, vector<32x64xf32>
    %cst_19 = arith.constant dense<0.000000e+00> : vector<64x64xf32>
    %53 = tpu.matmul %51, %52, %cst_19 {dimension_numbers = #tpu.dot_dimension_numbers<[1], [0], [0], [1], [0, 0, 1, 1], [], []>} : vector<64x32xf32>, vector<32x64xf32>, vector<64x64xf32> -> vector<64x64xf32>
    %c0_20 = arith.constant 0 : index
    %c0_21 = arith.constant 0 : index
    %54 = vector.load %arg9[%c0_20, %c0_21] : memref<1x64xf32, #tpu.memory_space<vmem>>, vector<1x64xf32>
    %55 = vector.broadcast %54 : vector<1x64xf32> to vector<64x64xf32>
    %56 = arith.addf %53, %55 : vector<64x64xf32>
    %cst_22 = arith.constant 0.000000e+00 : f32
    %57 = vector.broadcast %cst_22 : f32 to vector<64x64xf32>
    %58 = arith.maximumf %56, %57 : vector<64x64xf32>
    %c0_23 = arith.constant 0 : index
    %c0_24 = arith.constant 0 : index
    %59 = vector.load %arg10[%c0_23, %c0_24] : memref<1x64xf32, #tpu.memory_space<vmem>>, vector<1x64xf32>
    %60 = vector.broadcast %59 : vector<1x64xf32> to vector<64x64xf32>
    %61 = arith.mulf %58, %60 : vector<64x64xf32>
    %cst_25 = arith.constant dense<0.000000e+00> : vector<64xf32>
    %62 = vector.multi_reduction <add>, %61, %cst_25 [1] : vector<64x64xf32> to vector<64xf32>
    %63 = vector.shape_cast %62 : vector<64xf32> to vector<64x1xf32>
    %c0_26 = arith.constant 0 : index
    %c0_27 = arith.constant 0 : index
    %64 = vector.load %arg11[%c0_26, %c0_27] : memref<1x1xf32, #tpu.memory_space<vmem>>, vector<1x1xf32>
    %65 = vector.broadcast %64 : vector<1x1xf32> to vector<64x1xf32>
    %66 = arith.addf %63, %65 : vector<64x1xf32>
    %cst_28 = arith.constant dense<0xFF800000> : vector<1xf32>
    %67 = vector.multi_reduction <maximumf>, %66, %cst_28 [0] : vector<64x1xf32> to vector<1xf32>
    %68 = vector.shape_cast %67 : vector<1xf32> to vector<1x1xf32>
    %69 = vector.broadcast %68 : vector<1x1xf32> to vector<64x1xf32>
    %70 = arith.subf %66, %69 : vector<64x1xf32>
    %71 = math.exp %70 : vector<64x1xf32>
    %c0_29 = arith.constant 0 : index
    %c0_30 = arith.constant 0 : index
    %72 = vector.load %arg2[%c0_29, %c0_30] : memref<8x64xf32, #tpu.memory_space<vmem>>, vector<8x64xf32>
    %cst_31 = arith.constant dense<0.000000e+00> : vector<8x1xf32>
    %73 = tpu.matmul %72, %71, %cst_31 {dimension_numbers = #tpu.dot_dimension_numbers<[1], [0], [0], [1], [0, 0, 1, 1], [], []>} : vector<8x64xf32>, vector<64x1xf32>, vector<8x1xf32> -> vector<8x1xf32>
    %74 = vector.broadcast %71 : vector<64x1xf32> to vector<64x32xf32>
    %75 = arith.mulf %51, %74 : vector<64x32xf32>
    %cst_32 = arith.constant dense<0.000000e+00> : vector<8x32xf32>
    %76 = tpu.matmul %72, %75, %cst_32 {dimension_numbers = #tpu.dot_dimension_numbers<[1], [0], [0], [1], [0, 0, 1, 1], [], []>} : vector<8x64xf32>, vector<64x32xf32>, vector<8x32xf32> -> vector<8x32xf32>
    %77 = vector.broadcast %73 : vector<8x1xf32> to vector<8x32xf32>
    %78 = arith.divf %76, %77 : vector<8x32xf32>
    %c0_33 = arith.constant 0 : index
    %c0_34 = arith.constant 0 : index
    %79 = vector.load %arg12[%c0_33, %c0_34] : memref<32x8xf32, #tpu.memory_space<vmem>>, vector<32x8xf32>
    %cst_35 = arith.constant dense<0.000000e+00> : vector<8x8xf32>
    %80 = tpu.matmul %78, %79, %cst_35 {dimension_numbers = #tpu.dot_dimension_numbers<[1], [0], [0], [1], [0, 0, 1, 1], [], []>} : vector<8x32xf32>, vector<32x8xf32>, vector<8x8xf32> -> vector<8x8xf32>
    %c0_36 = arith.constant 0 : index
    %c0_37 = arith.constant 0 : index
    %81 = vector.load %arg13[%c0_36, %c0_37] : memref<1x8xf32, #tpu.memory_space<vmem>>, vector<1x8xf32>
    %82 = vector.broadcast %81 : vector<1x8xf32> to vector<8x8xf32>
    %83 = arith.addf %80, %82 : vector<8x8xf32>
    %c0_38 = arith.constant 0 : index
    %c0_39 = arith.constant 0 : index
    %84 = vector.load %arg14[%c0_38, %c0_39] : memref<8x8xf32, #tpu.memory_space<vmem>>, vector<8x8xf32>
    tpu.vector_store %arg14[%c0_38, %c0_39], %83 {strides = array<i32>} : memref<8x8xf32, #tpu.memory_space<vmem>>, vector<8x8xf32>,
    return
  }
  func.func @transform_0(%arg0: i32) -> (i32, i32) {
    %c0_i32 = arith.constant 0 : i32
    %c0_i32_0 = arith.constant 0 : i32
    return %arg0, %c0_i32 : i32, i32
  }
  func.func @transform_1(%arg0: i32) -> (i32, i32) {
    %c0_i32 = arith.constant 0 : i32
    %c0_i32_0 = arith.constant 0 : i32
    %c0_i32_1 = arith.constant 0 : i32
    return %c0_i32, %c0_i32_0 : i32, i32
  }
  func.func @transform_2(%arg0: i32) -> (i32, i32) {
    %c0_i32 = arith.constant 0 : i32
    %c0_i32_0 = arith.constant 0 : i32
    %c0_i32_1 = arith.constant 0 : i32
    return %c0_i32, %c0_i32_0 : i32, i32
  }
  func.func @transform_3(%arg0: i32) -> (i32, i32) {
    %c0_i32 = arith.constant 0 : i32
    %c0_i32_0 = arith.constant 0 : i32
    %c0_i32_1 = arith.constant 0 : i32
    return %c0_i32, %c0_i32_0 : i32, i32
  }
  func.func @transform_4(%arg0: i32) -> (i32, i32) {
    %c0_i32 = arith.constant 0 : i32
    %c0_i32_0 = arith.constant 0 : i32
    %c0_i32_1 = arith.constant 0 : i32
    return %c0_i32, %c0_i32_0 : i32, i32
  }
  func.func @transform_5(%arg0: i32) -> (i32, i32) {
    %c0_i32 = arith.constant 0 : i32
    %c0_i32_0 = arith.constant 0 : i32
    %c0_i32_1 = arith.constant 0 : i32
    return %c0_i32, %c0_i32_0 : i32, i32
  }
  func.func @transform_6(%arg0: i32) -> (i32, i32) {
    %c0_i32 = arith.constant 0 : i32
    %c0_i32_0 = arith.constant 0 : i32
    %c0_i32_1 = arith.constant 0 : i32
    return %c0_i32, %c0_i32_0 : i32, i32
  }
  func.func @transform_7(%arg0: i32) -> (i32, i32) {
    %c0_i32 = arith.constant 0 : i32
    %c0_i32_0 = arith.constant 0 : i32
    %c0_i32_1 = arith.constant 0 : i32
    return %c0_i32, %c0_i32_0 : i32, i32
  }
  func.func @transform_8(%arg0: i32) -> (i32, i32) {
    %c0_i32 = arith.constant 0 : i32
    %c0_i32_0 = arith.constant 0 : i32
    %c0_i32_1 = arith.constant 0 : i32
    return %c0_i32, %c0_i32_0 : i32, i32
  }
  func.func @transform_9(%arg0: i32) -> (i32, i32) {
    %c0_i32 = arith.constant 0 : i32
    %c0_i32_0 = arith.constant 0 : i32
    %c0_i32_1 = arith.constant 0 : i32
    return %c0_i32, %c0_i32_0 : i32, i32
  }
  func.func @transform_10(%arg0: i32) -> (i32, i32) {
    %c0_i32 = arith.constant 0 : i32
    %c0_i32_0 = arith.constant 0 : i32
    %c0_i32_1 = arith.constant 0 : i32
    return %c0_i32, %c0_i32_0 : i32, i32
  }
  func.func @transform_11(%arg0: i32) -> (i32, i32) {
    %c0_i32 = arith.constant 0 : i32
    %c0_i32_0 = arith.constant 0 : i32
    %c0_i32_1 = arith.constant 0 : i32
    return %c0_i32, %c0_i32_0 : i32, i32
  }
  func.func @transform_12(%arg0: i32) -> (i32, i32) {
    %c0_i32 = arith.constant 0 : i32
    %c0_i32_0 = arith.constant 0 : i32
    %c0_i32_1 = arith.constant 0 : i32
    return %c0_i32, %c0_i32_0 : i32, i32
  }
  func.func @transform_13(%arg0: i32) -> (i32, i32) {
    %c0_i32 = arith.constant 0 : i32
    %c0_i32_0 = arith.constant 0 : i32
    return %arg0, %c0_i32 : i32, i32
  }
}

</mosaic_0001>

<llo_original>
// kernel: tpu_custom_call.1
$region0: #{tpu_custom_call.1}
  #allocation0 [shape = 'u32[]', space=smem, size = 0x4, offset = 0x4, fixed_abs, tag = 'smem constant byte address 0x4 - core index']
  #allocation1 [shape = 'u32[72,128]{1,0:T(1,128)}', space=vmem, size = 0x9000, scoped, tag = 'internal scratch']
  #allocation2 [shape = 'f32[1,1]{1,0:T(1,128)S(1)}', space=vmem, size = 0x200, scoped, tag = 'scoped memory for tpu_custom_call.1']
  %s0 = inlined_call_operand.vmem [shape: s32[128,1], index: 0, kind: input, shape index: {}]
  %s1 = inlined_call_operand.vmem [shape: f32[8,64], index: 1, kind: input, shape index: {}]
  %s2 = inlined_call_operand.vmem [shape: f32[32,16], index: 2, kind: input, shape index: {}]
  %s3 = inlined_call_operand.vmem [shape: f32[16,128], index: 3, kind: input, shape index: {}]
  %s4 = inlined_call_operand.vmem [shape: f32[1,128], index: 4, kind: input, shape index: {}]
  %s5 = inlined_call_operand.vmem [shape: f32[32,128], index: 5, kind: input, shape index: {}]
  %s6 = inlined_call_operand.vmem [shape: f32[1,128], index: 6, kind: input, shape index: {}]
  %s7 = inlined_call_operand.vmem [shape: f32[32,64], index: 7, kind: input, shape index: {}]
  %s8 = inlined_call_operand.vmem [shape: f32[1,64], index: 8, kind: input, shape index: {}]
  %s9 = inlined_call_operand.vmem [shape: f32[1,64], index: 9, kind: input, shape index: {}]
  %s10 = inlined_call_operand.<no memory space> [shape: f32[1,1], index: 10, kind: input, shape index: {}]
  %s11 = inlined_call_operand.vmem [shape: f32[32,8], index: 11, kind: input, shape index: {}]
  %s12 = inlined_call_operand.vmem [shape: f32[1,8], index: 12, kind: input, shape index: {}]
  %s13 = inlined_call_operand.vmem [shape: f32[16,8], index: 13, kind: output, shape index: {}]
  %s14 = sld [smem:[#allocation0]]
  $region85: #{tpu_custom_call.1} parent=0
    _
  %s16 = ssub.s32 1, %s14
  %s17 = scalar_select 0, %s16, %s14
  %v18 = vstv %s10
  %19 = vst [vmem:[#allocation2] sm:$0x1] %v18
  loop: start=0, step=1, limit=4
  $region2: #{tpu_custom_call.1} parent=0 // loop_pre_header
    _
  $region3: #{tpu_custom_call.1} parent=0 // loop_header
    %s21 = sphi 0, %s25
    %p22 = scmp.ge.s32.totalorder %s21, 4
    %s31 = sphi 0, %s33
    %s34 = sphi 0, %s31
    %s35 = sphi 0, %s34
    %s51 = sphi 0, %s35
    %s55 = sphi 0, %s55
    %s57 = sphi 0, %s55
    %s58 = sphi 0, %s57
    %s72 = sphi 0, %s58
    %s76 = sphi 0, %s76
    %s78 = sphi 0, %s76
    %s79 = sphi 0, %s78
    %s93 = sphi 0, %s79
    %s97 = sphi 0, %s97
    %s99 = sphi 0, %s97
    %s100 = sphi 0, %s99
    %s114 = sphi 0, %s100
    %s118 = sphi 0, %s118
    %s120 = sphi 0, %s118
    %s121 = sphi 0, %s120
    %s135 = sphi 0, %s121
    %s139 = sphi 0, %s139
    %s141 = sphi 0, %s139
    %s142 = sphi 0, %s141
    %s156 = sphi 0, %s142
    %s160 = sphi 0, %s160
    %s162 = sphi 0, %s160
    %s163 = sphi 0, %s162
    %s177 = sphi 0, %s163
    %s181 = sphi 0, %s181
    %s183 = sphi 0, %s181
    %s184 = sphi 0, %s183
    %s198 = sphi 0, %s184
    %s202 = sphi 0, %s202
    %s204 = sphi 0, %s202
    %s205 = sphi 0, %s204
    %s219 = sphi 0, %s205
    %s223 = sphi 0, %s223
    %s225 = sphi 0, %s223
    %s226 = sphi 0, %s225
    %s240 = sphi 0, %s226
    %s244 = sphi 0, %s244
    %s246 = sphi 0, %s244
    %s247 = sphi 0, %s246
    %s261 = sphi 0, %s247
    %s265 = sphi 0, %s265
    %s267 = sphi 0, %s265
    %s268 = sphi 0, %s267
    %s282 = sphi 0, %s268
    %s286 = sphi 0, %s286
    %s288 = sphi 0, %s286
    %s289 = sphi 0, %s288
    %s303 = sphi 0, %s289
    %s309 = sphi 0, %s311
    %s312 = sphi 0, %s309
    %s313 = sphi 0, %s312
    %s329 = sphi 0, %s313
  $region4: #{tpu_custom_call.1} parent=0 // loop_header_branch
    %24 = sbr.rel (%p22) target = $region8
  $region5: #{tpu_custom_call.1} parent=0 // loop_body
    %s26 = ssub.s32 %s21, 1
    %s27 = ssub.s32 %s21, 2
    %s28 = sadd.s32 %s21, 1
    %s29 = ssub.s32 %s21, %s28
    %p30 = scmp.eq.s32.totalorder %s29, 0
    %s32 = sadd.s32 %s31, 1
    %s33 = scalar_select %p30, %s31, %s32
    %p36 = pneg %p30
    %p37 = scmp.eq.s32.totalorder %s21, 1
    %p38 = por %p36, %p37
    %p39 = scmp.ne.s32.totalorder %s31, %s34
    %p40 = scmp.eq.s32.totalorder %s21, 0
    %p41 = por %p39, %p40
    %p42 = scmp.ne.s32.totalorder %s31, %s34
    %p43 = scmp.eq.s32.totalorder %s26, 1
    %p44 = por %p42, %p43
    %p45 = scmp.ne.s32.totalorder %s34, %s35
    %p46 = scmp.eq.s32.totalorder %s26, 0
    %p47 = por %p45, %p46
    %p48 = scmp.ne.s32.totalorder %s34, %s35
    %p49 = scmp.eq.s32.totalorder %s27, 1
    %p50 = por %p48, %p49
    %p52 = scmp.ne.s32.totalorder %s35, %s51
    %p53 = scmp.eq.s32.totalorder %s27, 0
    %p54 = por %p52, %p53
    %s56 = sadd.s32 %s55, 1
    %p59 = scmp.eq.s32.totalorder %s21, 1
    %p60 = scmp.ne.s32.totalorder %s55, %s57
    %p61 = scmp.eq.s32.totalorder %s21, 0
    %p62 = por %p60, %p61
    %p63 = scmp.ne.s32.totalorder %s55, %s57
    %p64 = scmp.eq.s32.totalorder %s26, 1
    %p65 = por %p63, %p64
    %p66 = scmp.ne.s32.totalorder %s57, %s58
    %p67 = scmp.eq.s32.totalorder %s26, 0
    %p68 = por %p66, %p67
    %p69 = scmp.ne.s32.totalorder %s57, %s58
    %p70 = scmp.eq.s32.totalorder %s27, 1
    %p71 = por %p69, %p70
    %p73 = scmp.ne.s32.totalorder %s58, %s72
    %p74 = scmp.eq.s32.totalorder %s27, 0
    %p75 = por %p73, %p74
    %s77 = sadd.s32 %s76, 1
    %p80 = scmp.eq.s32.totalorder %s21, 1
    %p81 = scmp.ne.s32.totalorder %s76, %s78
    %p82 = scmp.eq.s32.totalorder %s21, 0
    %p83 = por %p81, %p82
    %p84 = scmp.ne.s32.totalorder %s76, %s78
    %p85 = scmp.eq.s32.totalorder %s26, 1
    %p86 = por %p84, %p85
    %p87 = scmp.ne.s32.totalorder %s78, %s79
    %p88 = scmp.eq.s32.totalorder %s26, 0
    %p89 = por %p87, %p88
    %p90 = scmp.ne.s32.totalorder %s78, %s79
    %p91 = scmp.eq.s32.totalorder %s27, 1
    %p92 = por %p90, %p91
    %p94 = scmp.ne.s32.totalorder %s79, %s93
    %p95 = scmp.eq.s32.totalorder %s27, 0
    %p96 = por %p94, %p95
    %s98 = sadd.s32 %s97, 1
    %p101 = scmp.eq.s32.totalorder %s21, 1
    %p102 = scmp.ne.s32.totalorder %s97, %s99
    %p103 = scmp.eq.s32.totalorder %s21, 0
    %p104 = por %p102, %p103
    %p105 = scmp.ne.s32.totalorder %s97, %s99
    %p106 = scmp.eq.s32.totalorder %s26, 1
    %p107 = por %p105, %p106
    %p108 = scmp.ne.s32.totalorder %s99, %s100
    %p109 = scmp.eq.s32.totalorder %s26, 0
    %p110 = por %p108, %p109
    %p111 = scmp.ne.s32.totalorder %s99, %s100
    %p112 = scmp.eq.s32.totalorder %s27, 1
    %p113 = por %p111, %p112
    %p115 = scmp.ne.s32.totalorder %s100, %s114
    %p116 = scmp.eq.s32.totalorder %s27, 0
    %p117 = por %p115, %p116
    %s119 = sadd.s32 %s118, 1
    %p122 = scmp.eq.s32.totalorder %s21, 1
    %p123 = scmp.ne.s32.totalorder %s118, %s120
    %p124 = scmp.eq.s32.totalorder %s21, 0
    %p125 = por %p123, %p124
    %p126 = scmp.ne.s32.totalorder %s118, %s120
    %p127 = scmp.eq.s32.totalorder %s26, 1
    %p128 = por %p126, %p127
    %p129 = scmp.ne.s32.totalorder %s120, %s121
    %p130 = scmp.eq.s32.totalorder %s26, 0
    %p131 = por %p129, %p130
    %p132 = scmp.ne.s32.totalorder %s120, %s121
    %p133 = scmp.eq.s32.totalorder %s27, 1
    %p134 = por %p132, %p133
    %p136 = scmp.ne.s32.totalorder %s121, %s135
    %p137 = scmp.eq.s32.totalorder %s27, 0
    %p138 = por %p136, %p137
    %s140 = sadd.s32 %s139, 1
    %p143 = scmp.eq.s32.totalorder %s21, 1
    %p144 = scmp.ne.s32.totalorder %s139, %s141
    %p145 = scmp.eq.s32.totalorder %s21, 0
    %p146 = por %p144, %p145
    %p147 = scmp.ne.s32.totalorder %s139, %s141
    %p148 = scmp.eq.s32.totalorder %s26, 1
    %p149 = por %p147, %p148
    %p150 = scmp.ne.s32.totalorder %s141, %s142
    %p151 = scmp.eq.s32.totalorder %s26, 0
    %p152 = por %p150, %p151
    %p153 = scmp.ne.s32.totalorder %s141, %s142
    %p154 = scmp.eq.s32.totalorder %s27, 1
    %p155 = por %p153, %p154
    %p157 = scmp.ne.s32.totalorder %s142, %s156
    %p158 = scmp.eq.s32.totalorder %s27, 0
    %p159 = por %p157, %p158
    %s161 = sadd.s32 %s160, 1
    %p164 = scmp.eq.s32.totalorder %s21, 1
    %p165 = scmp.ne.s32.totalorder %s160, %s162
    %p166 = scmp.eq.s32.totalorder %s21, 0
    %p167 = por %p165, %p166
    %p168 = scmp.ne.s32.totalorder %s160, %s162
    %p169 = scmp.eq.s32.totalorder %s26, 1
    %p170 = por %p168, %p169
    %p171 = scmp.ne.s32.totalorder %s162, %s163
    %p172 = scmp.eq.s32.totalorder %s26, 0
    %p173 = por %p171, %p172
    %p174 = scmp.ne.s32.totalorder %s162, %s163
    %p175 = scmp.eq.s32.totalorder %s27, 1
    %p176 = por %p174, %p175
    %p178 = scmp.ne.s32.totalorder %s163, %s177
    %p179 = scmp.eq.s32.totalorder %s27, 0
    %p180 = por %p178, %p179
    %s182 = sadd.s32 %s181, 1
    %p185 = scmp.eq.s32.totalorder %s21, 1
    %p186 = scmp.ne.s32.totalorder %s181, %s183
    %p187 = scmp.eq.s32.totalorder %s21, 0
    %p188 = por %p186, %p187
    %p189 = scmp.ne.s32.totalorder %s181, %s183
    %p190 = scmp.eq.s32.totalorder %s26, 1
    %p191 = por %p189, %p190
    %p192 = scmp.ne.s32.totalorder %s183, %s184
    %p193 = scmp.eq.s32.totalorder %s26, 0
    %p194 = por %p192, %p193
    %p195 = scmp.ne.s32.totalorder %s183, %s184
    %p196 = scmp.eq.s32.totalorder %s27, 1
    %p197 = por %p195, %p196
    %p199 = scmp.ne.s32.totalorder %s184, %s198
    %p200 = scmp.eq.s32.totalorder %s27, 0
    %p201 = por %p199, %p200
    %s203 = sadd.s32 %s202, 1
    %p206 = scmp.eq.s32.totalorder %s21, 1
    %p207 = scmp.ne.s32.totalorder %s202, %s204
    %p208 = scmp.eq.s32.totalorder %s21, 0
    %p209 = por %p207, %p208
    %p210 = scmp.ne.s32.totalorder %s202, %s204
    %p211 = scmp.eq.s32.totalorder %s26, 1
    %p212 = por %p210, %p211
    %p213 = scmp.ne.s32.totalorder %s204, %s205
    %p214 = scmp.eq.s32.totalorder %s26, 0
    %p215 = por %p213, %p214
    %p216 = scmp.ne.s32.totalorder %s204, %s205
    %p217 = scmp.eq.s32.totalorder %s27, 1
    %p218 = por %p216, %p217
    %p220 = scmp.ne.s32.totalorder %s205, %s219
    %p221 = scmp.eq.s32.totalorder %s27, 0
    %p222 = por %p220, %p221
    %s224 = sadd.s32 %s223, 1
    %p227 = scmp.eq.s32.totalorder %s21, 1
    %p228 = scmp.ne.s32.totalorder %s223, %s225
    %p229 = scmp.eq.s32.totalorder %s21, 0
    %p230 = por %p228, %p229
    %p231 = scmp.ne.s32.totalorder %s223, %s225
    %p232 = scmp.eq.s32.totalorder %s26, 1
    %p233 = por %p231, %p232
    %p234 = scmp.ne.s32.totalorder %s225, %s226
    %p235 = scmp.eq.s32.totalorder %s26, 0
    %p236 = por %p234, %p235
    %p237 = scmp.ne.s32.totalorder %s225, %s226
    %p238 = scmp.eq.s32.totalorder %s27, 1
    %p239 = por %p237, %p238
    %p241 = scmp.ne.s32.totalorder %s226, %s240
    %p242 = scmp.eq.s32.totalorder %s27, 0
    %p243 = por %p241, %p242
    %s245 = sadd.s32 %s244, 1
    %p248 = scmp.eq.s32.totalorder %s21, 1
    %p249 = scmp.ne.s32.totalorder %s244, %s246
    %p250 = scmp.eq.s32.totalorder %s21, 0
    %p251 = por %p249, %p250
    %p252 = scmp.ne.s32.totalorder %s244, %s246
    %p253 = scmp.eq.s32.totalorder %s26, 1
    %p254 = por %p252, %p253
    %p255 = scmp.ne.s32.totalorder %s246, %s247
    %p256 = scmp.eq.s32.totalorder %s26, 0
    %p257 = por %p255, %p256
    %p258 = scmp.ne.s32.totalorder %s246, %s247
    %p259 = scmp.eq.s32.totalorder %s27, 1
    %p260 = por %p258, %p259
    %p262 = scmp.ne.s32.totalorder %s247, %s261
    %p263 = scmp.eq.s32.totalorder %s27, 0
    %p264 = por %p262, %p263
    %s266 = sadd.s32 %s265, 1
    %p269 = scmp.eq.s32.totalorder %s21, 1
    %p270 = scmp.ne.s32.totalorder %s265, %s267
    %p271 = scmp.eq.s32.totalorder %s21, 0
    %p272 = por %p270, %p271
    %p273 = scmp.ne.s32.totalorder %s265, %s267
    %p274 = scmp.eq.s32.totalorder %s26, 1
    %p275 = por %p273, %p274
    %p276 = scmp.ne.s32.totalorder %s267, %s268
    %p277 = scmp.eq.s32.totalorder %s26, 0
    %p278 = por %p276, %p277
    %p279 = scmp.ne.s32.totalorder %s267, %s268
    %p280 = scmp.eq.s32.totalorder %s27, 1
    %p281 = por %p279, %p280
    %p283 = scmp.ne.s32.totalorder %s268, %s282
    %p284 = scmp.eq.s32.totalorder %s27, 0
    %p285 = por %p283, %p284
    %s287 = sadd.s32 %s286, 1
    %p290 = scmp.eq.s32.totalorder %s21, 1
    %p291 = scmp.ne.s32.totalorder %s286, %s288
    %p292 = scmp.eq.s32.totalorder %s21, 0
    %p293 = por %p291, %p292
    %p294 = scmp.ne.s32.totalorder %s286, %s288
    %p295 = scmp.eq.s32.totalorder %s26, 1
    %p296 = por %p294, %p295
    %p297 = scmp.ne.s32.totalorder %s288, %s289
    %p298 = scmp.eq.s32.totalorder %s26, 0
    %p299 = por %p297, %p298
    %p300 = scmp.ne.s32.totalorder %s288, %s289
    %p301 = scmp.eq.s32.totalorder %s27, 1
    %p302 = por %p300, %p301
    %p304 = scmp.ne.s32.totalorder %s289, %s303
    %p305 = scmp.eq.s32.totalorder %s27, 0
    %p306 = por %p304, %p305
    %s307 = ssub.s32 %s21, %s28
    %p308 = scmp.eq.s32.totalorder %s307, 0
    %s310 = sadd.s32 %s309, 1
    %s311 = scalar_select %p308, %s309, %s310
    %p314 = pneg %p308
    %p315 = scmp.eq.s32.totalorder %s21, 1
    %p316 = por %p314, %p315
    %p317 = scmp.ne.s32.totalorder %s309, %s312
    %p318 = scmp.eq.s32.totalorder %s21, 0
    %p319 = por %p317, %p318
    %p320 = scmp.ne.s32.totalorder %s309, %s312
    %p321 = scmp.eq.s32.totalorder %s26, 1
    %p322 = por %p320, %p321
    %p323 = scmp.ne.s32.totalorder %s312, %s313
    %p324 = scmp.eq.s32.totalorder %s26, 0
    %p325 = por %p323, %p324
    %p326 = scmp.ne.s32.totalorder %s312, %s313
    %p327 = scmp.eq.s32.totalorder %s27, 1
    %p328 = por %p326, %p327
    %p330 = scmp.ne.s32.totalorder %s313, %s329
    %p331 = scmp.eq.s32.totalorder %s27, 0
    %p332 = por %p330, %p331
    %p333 = scmp.le.s32.totalorder 1, %s21
    %p334 = scmp.lt.s32.totalorder %s21, 3
    %p335 = pnand %p333, %p334
    %p336 = pneg %p335
    // Predicated region
    $region9: #{tpu_custom_call.1} parent=5 // pred_check
      _
    $region10: #{tpu_custom_call.1} parent=5 // pred_check_branch
      %338 = sbr.rel (%p335) target = $region12
    $region11: #{tpu_custom_call.1} parent=5 // pred_region
      %s339 = ssub.s32 %s21, 1
      // Predicated region
      $region13: #{tpu_custom_call.1} parent=11 // pred_check
        %p340 = pneg %p68
      $region14: #{tpu_custom_call.1} parent=11 // pred_check_branch
        %342 = sbr.rel (%p340) target = $region16
      $region15: #{tpu_custom_call.1} parent=11 // pred_region
        _
      $region16: #{tpu_custom_call.1} parent=11 // pred_fallthru
        _
      // Predicated region
      $region17: #{tpu_custom_call.1} parent=11 // pred_check
        %p343 = pneg %p89
      $region18: #{tpu_custom_call.1} parent=11 // pred_check_branch
        %345 = sbr.rel (%p343) target = $region20
      $region19: #{tpu_custom_call.1} parent=11 // pred_region
        _
      $region20: #{tpu_custom_call.1} parent=11 // pred_fallthru
        _
      // Predicated region
      $region21: #{tpu_custom_call.1} parent=11 // pred_check
        %p346 = pneg %p110
      $region22: #{tpu_custom_call.1} parent=11 // pred_check_branch
        %348 = sbr.rel (%p346) target = $region24
      $region23: #{tpu_custom_call.1} parent=11 // pred_region
        _
      $region24: #{tpu_custom_call.1} parent=11 // pred_fallthru
        _
      // Predicated region
      $region25: #{tpu_custom_call.1} parent=11 // pred_check
        %p349 = pneg %p131
      $region26: #{tpu_custom_call.1} parent=11 // pred_check_branch
        %351 = sbr.rel (%p349) target = $region28
      $region27: #{tpu_custom_call.1} parent=11 // pred_region
        _
      $region28: #{tpu_custom_call.1} parent=11 // pred_fallthru
        _
      // Predicated region
      $region29: #{tpu_custom_call.1} parent=11 // pred_check
        %p352 = pneg %p152
      $region30: #{tpu_custom_call.1} parent=11 // pred_check_branch
        %354 = sbr.rel (%p352) target = $region32
      $region31: #{tpu_custom_call.1} parent=11 // pred_region
        _
      $region32: #{tpu_custom_call.1} parent=11 // pred_fallthru
        _
      // Predicated region
      $region33: #{tpu_custom_call.1} parent=11 // pred_check
        %p355 = pneg %p173
      $region34: #{tpu_custom_call.1} parent=11 // pred_check_branch
        %357 = sbr.rel (%p355) target = $region36
      $region35: #{tpu_custom_call.1} parent=11 // pred_region
        _
      $region36: #{tpu_custom_call.1} parent=11 // pred_fallthru
        _
      // Predicated region
      $region37: #{tpu_custom_call.1} parent=11 // pred_check
        %p358 = pneg %p194
      $region38: #{tpu_custom_call.1} parent=11 // pred_check_branch
        %360 = sbr.rel (%p358) target = $region40
      $region39: #{tpu_custom_call.1} parent=11 // pred_region
        _
      $region40: #{tpu_custom_call.1} parent=11 // pred_fallthru
        _
      // Predicated region
      $region41: #{tpu_custom_call.1} parent=11 // pred_check
        %p361 = pneg %p215
      $region42: #{tpu_custom_call.1} parent=11 // pred_check_branch
        %363 = sbr.rel (%p361) target = $region44
      $region43: #{tpu_custom_call.1} parent=11 // pred_region
        _
      $region44: #{tpu_custom_call.1} parent=11 // pred_fallthru
        _
      // Predicated region
      $region45: #{tpu_custom_call.1} parent=11 // pred_check
        %p364 = pneg %p236
      $region46: #{tpu_custom_call.1} parent=11 // pred_check_branch
        %366 = sbr.rel (%p364) target = $region48
      $region47: #{tpu_custom_call.1} parent=11 // pred_region
        _
      $region48: #{tpu_custom_call.1} parent=11 // pred_fallthru
        _
      // Predicated region
      $region49: #{tpu_custom_call.1} parent=11 // pred_check
        %p367 = pneg %p257
      $region50: #{tpu_custom_call.1} parent=11 // pred_check_branch
        %369 = sbr.rel (%p367) target = $region52
      $region51: #{tpu_custom_call.1} parent=11 // pred_region
        _
      $region52: #{tpu_custom_call.1} parent=11 // pred_fallthru
        _
      // Predicated region
      $region53: #{tpu_custom_call.1} parent=11 // pred_check
        %p370 = pneg %p278
      $region54: #{tpu_custom_call.1} parent=11 // pred_check_branch
        %372 = sbr.rel (%p370) target = $region56
      $region55: #{tpu_custom_call.1} parent=11 // pred_region
        _
      $region56: #{tpu_custom_call.1} parent=11 // pred_fallthru
        _
      // Predicated region
      $region57: #{tpu_custom_call.1} parent=11 // pred_check
        %p373 = pneg %p299
      $region58: #{tpu_custom_call.1} parent=11 // pred_check_branch
        %375 = sbr.rel (%p373) target = $region60
      $region59: #{tpu_custom_call.1} parent=11 // pred_region
        _
      $region60: #{tpu_custom_call.1} parent=11 // pred_fallthru
        _
    $region12: #{tpu_custom_call.1} parent=5 // pred_fallthru
      _
    %p376 = scmp.lt.s32.totalorder %s21, 2
    // Predicated region
    $region61: #{tpu_custom_call.1} parent=5 // pred_check
      %p377 = pneg %p376
    $region62: #{tpu_custom_call.1} parent=5 // pred_check_branch
      %379 = sbr.rel (%p377) target = $region64
    $region63: #{tpu_custom_call.1} parent=5 // pred_region
      // Predicated region
      $region65: #{tpu_custom_call.1} parent=63 // pred_check
        %p380 = pneg %p41
      $region66: #{tpu_custom_call.1} parent=63 // pred_check_branch
        %382 = sbr.rel (%p380) target = $region68
      $region67: #{tpu_custom_call.1} parent=63 // pred_region
        %s383 = smul.u32 8, %s21
        %p384 = scmp.lt.s32.totalorder %s383, 15
        %s385 = scalar_select %p384, %s383, 15
        %s386 = smul.addr %s385, 8
        %s387 = scalar_lea.vmem %s0, %s386
        %s388 = smul.u32 8, %s21
      $region68: #{tpu_custom_call.1} parent=63 // pred_fallthru
        _
    $region64: #{tpu_custom_call.1} parent=5 // pred_fallthru
      _
    %p389 = scmp.le.s32.totalorder 1, %s21
    %p390 = scmp.lt.s32.totalorder %s21, 3
    %p391 = pnand %p389, %p390
    %p392 = pneg %p391
    // Predicated region
    $region69: #{tpu_custom_call.1} parent=5 // pred_check
      _
    $region70: #{tpu_custom_call.1} parent=5 // pred_check_branch
      %394 = sbr.rel (%p391) target = $region72
    $region71: #{tpu_custom_call.1} parent=5 // pred_region
      %s395 = ssub.s32 %s21, 1
      %s396 = smul.u32 8, %s26
      %p397 = scmp.lt.s32.totalorder %s396, 15
      %s398 = scalar_select %p397, %s396, 15
      %s399 = smul.addr %s398, 8
      %s400 = scalar_lea.vmem %s0, %s399
      %p401 = pneg %p47
      %p402 = pneg %p44
      %p403 = pneg %p68
      %p404 = pneg %p65
      %p405 = pneg %p89
      %p406 = pneg %p86
      %p407 = pneg %p110
      %p408 = pneg %p107
      %p409 = pneg %p131
      %p410 = pneg %p128
      %p411 = pneg %p152
      %p412 = pneg %p149
      %p413 = pneg %p173
      %p414 = pneg %p170
      %p415 = pneg %p194
      %p416 = pneg %p191
      %p417 = pneg %p215
      %p418 = pneg %p212
      %p419 = pneg %p236
      %p420 = pneg %p233
      %p421 = pneg %p257
      %p422 = pneg %p254
      %p423 = pneg %p278
      %p424 = pneg %p275
      %p425 = pneg %p299
      %p426 = pneg %p296
      %p427 = pneg %p325
      %p428 = pneg %p322
      %p429 = scmp.lt.s32.totalorder %s26, 1
      %s430 = scalar_select %p429, %s26, 1
      %s431 = smul.addr %s430, 8
      %s432 = scalar_lea.vmem %s13, %s431
      %s433 = smul.u32 8, %s26
      %p434 = scmp.lt.s32.totalorder %s433, 15
      %s435 = scalar_select %p434, %s433, 15
      %s436 = smul.addr %s435, 8
      %s437 = scalar_lea.vmem %s0, %s436
      %s438 = smul.u32 8, %s26
      %p439 = scmp.lt.s32.totalorder %s26, 1
      %s440 = scalar_select %p439, %s26, 1
      %s441 = smul.addr %s440, 8
      %s442 = scalar_lea.vmem %s13, %s441
      %v443 = vlaneseq
      %v444 = vand.u32 %v443, 127
      %v445 = vld [vmem:[%s437] sm:$0xff]
      %v446 = vld [vmem:[%s437 + $0x8] sm:$0xff]
      %v447 = vld [vmem:[%s437 + $0x10] sm:$0xff]
      %v448 = vld [vmem:[%s437 + $0x18] sm:$0xff]
      %v449 = vld [vmem:[%s437 + $0x20] sm:$0xff]
      %v450 = vld [vmem:[%s437 + $0x28] sm:$0xff]
      %v451 = vld [vmem:[%s437 + $0x30] sm:$0xff]
      %v452 = vld [vmem:[%s437 + $0x38] sm:$0xff]
      %453 = vset.pattern.permute.xlu0 0
      %454 = vperm.xlu0 %453, %v445
      %v455 = vpop.permute.xlu0 %454
      %456 = vset.pattern.permute.xlu0 0
      %457 = vperm.xlu0 %456, %v446
      %v458 = vpop.permute.xlu0 %457
      %459 = vset.pattern.permute.xlu0 0
      %460 = vperm.xlu0 %459, %v447
      %v461 = vpop.permute.xlu0 %460
      %462 = vset.pattern.permute.xlu0 0
      %463 = vperm.xlu0 %462, %v448
      %v464 = vpop.permute.xlu0 %463
      %465 = vset.pattern.permute.xlu0 0
      %466 = vperm.xlu0 %465, %v449
      %v467 = vpop.permute.xlu0 %466
      %468 = vset.pattern.permute.xlu0 0
      %469 = vperm.xlu0 %468, %v450
      %v470 = vpop.permute.xlu0 %469
      %471 = vset.pattern.permute.xlu0 0
      %472 = vperm.xlu0 %471, %v451
      %v473 = vpop.permute.xlu0 %472
      %474 = vset.pattern.permute.xlu0 0
      %475 = vperm.xlu0 %474, %v452
      %v476 = vpop.permute.xlu0 %475
      %vm477 = vcmp.eq.s32.totalorder %v444, %v455
      %vm478 = vcmp.eq.s32.totalorder %v444, %v458
      %vm479 = vcmp.eq.s32.totalorder %v444, %v461
      %vm480 = vcmp.eq.s32.totalorder %v444, %v464
      %vm481 = vcmp.eq.s32.totalorder %v444, %v467
      %vm482 = vcmp.eq.s32.totalorder %v444, %v470
      %vm483 = vcmp.eq.s32.totalorder %v444, %v473
      %vm484 = vcmp.eq.s32.totalorder %v444, %v476
      %v485 = vsel %vm477, 1, 0
      %v486 = vsel %vm478, 1, 0
      %v487 = vsel %vm479, 1, 0
      %v488 = vsel %vm480, 1, 0
      %v489 = vsel %vm481, 1, 0
      %v490 = vsel %vm482, 1, 0
      %v491 = vsel %vm483, 1, 0
      %v492 = vsel %vm484, 1, 0
      %v493 = vcvt.s32.f32 %v485
      %v494 = vcvt.s32.f32 %v486
      %v495 = vcvt.s32.f32 %v487
      %v496 = vcvt.s32.f32 %v488
      %v497 = vcvt.s32.f32 %v489
      %v498 = vcvt.s32.f32 %v490
      %v499 = vcvt.s32.f32 %v491
      %v500 = vcvt.s32.f32 %v492
      %v501 = vld [vmem:[%s2] sm:$0xff]
      %v502 = vld [vmem:[%s2 + $0x8] sm:$0xff]
      %v503 = vld [vmem:[%s2 + $0x10] sm:$0xff]
      %v504 = vld [vmem:[%s2 + $0x18] sm:$0xff]
      %vm505 = vcmask 261120
      %v507 = vsel %vm505, %v493, 0
      %v510 = vsel %vm505, %v494, 0
      %v513 = vsel %vm505, %v495, 0
      %v516 = vsel %vm505, %v496, 0
      %v519 = vsel %vm505, %v497, 0
      %v522 = vsel %vm505, %v498, 0
      %v525 = vsel %vm505, %v499, 0
      %v528 = vsel %vm505, %v500, 0
      %530 = vmatpush.msra.mxu0 0.0
      %531 = vmatpush.msra.mxu0 0.0
      %532 = vmatpush.msra.mxu0 0.0
      %533 = vmatpush.msra.mxu0 0.0
      %534 = vmatpush.msra.mxu0 0.0
      %535 = vmatpush.msra.mxu0 0.0
      %536 = vmatpush.msra.mxu0 0.0
      %537 = vmatpush.msra.mxu0 0.0
      %538 = vmatpush.msra.mxu0 0.0
      %539 = vmatpush.msra.mxu0 0.0
      %540 = vmatpush.msra.mxu0 0.0
      %541 = vmatpush.msra.mxu0 0.0
      %542 = vmatpush.msra.mxu0 %v504
      %543 = vmatpush.msra.mxu0 %v503
      %544 = vmatpush.msra.mxu0 %v502
      %545 = vmatpush.msra.mxu0 %v501
      %546 = vmatmul.f32.gmra.mxu0 %v507
      %v547 = vpop.f32.mrf.mxu0
      %v548 = vadd.f32 0.0, %v547
      %549 = vmatmul.f32.gmra.mxu0 %v510
      %v550 = vpop.f32.mrf.mxu0
      %v551 = vadd.f32 0.0, %v550
      %552 = vmatmul.f32.gmra.mxu0 %v513
      %v553 = vpop.f32.mrf.mxu0
      %v554 = vadd.f32 0.0, %v553
      %555 = vmatmul.f32.gmra.mxu0 %v516
      %v556 = vpop.f32.mrf.mxu0
      %v557 = vadd.f32 0.0, %v556
      %558 = vmatmul.f32.gmra.mxu0 %v519
      %v559 = vpop.f32.mrf.mxu0
      %v560 = vadd.f32 0.0, %v559
      %561 = vmatmul.f32.gmra.mxu0 %v522
      %v562 = vpop.f32.mrf.mxu0
      %v563 = vadd.f32 0.0, %v562
      %564 = vmatmul.f32.gmra.mxu0 %v525
      %v565 = vpop.f32.mrf.mxu0
      %v566 = vadd.f32 0.0, %v565
      %567 = vmatmul.f32.gmra.mxu0 %v528
      %v568 = vpop.f32.mrf.mxu0
      %v569 = vadd.f32 0.0, %v568
      %570 = vdwg.mxu0
      %v571 = vld [vmem:[%s3] sm:$0xff]
      %v572 = vld [vmem:[%s3 + $0x8] sm:$0xff]
      %v573 = vld [vmem:[%s4] sm:$0x1]
      %v575 = vperm.slane %v573, 0
      %vm577 = vcmask 130048
      %v579 = vsel %vm577, %v548, 0
      %v582 = vsel %vm577, %v551, 0
      %v585 = vsel %vm577, %v554, 0
      %v588 = vsel %vm577, %v557, 0
      %v591 = vsel %vm577, %v560, 0
      %v594 = vsel %vm577, %v563, 0
      %v597 = vsel %vm577, %v566, 0
      %v600 = vsel %vm577, %v569, 0
      %602 = vmatpush.msra.mxu0 0.0
      %603 = vmatpush.msra.mxu0 0.0
      %604 = vmatpush.msra.mxu0 0.0
      %605 = vmatpush.msra.mxu0 0.0
      %606 = vmatpush.msra.mxu0 0.0
      %607 = vmatpush.msra.mxu0 0.0
      %608 = vmatpush.msra.mxu0 0.0
      %609 = vmatpush.msra.mxu0 0.0
      %610 = vmatpush.msra.mxu0 0.0
      %611 = vmatpush.msra.mxu0 0.0
      %612 = vmatpush.msra.mxu0 0.0
      %613 = vmatpush.msra.mxu0 0.0
      %614 = vmatpush.msra.mxu0 0.0
      %615 = vmatpush.msra.mxu0 0.0
      %616 = vmatpush.msra.mxu0 %v572
      %617 = vmatpush.msra.mxu0 %v571
      %618 = vmatmul.f32.gmra.mxu0 %v579
      %v619 = vpop.f32.mrf.mxu0
      %v620 = vadd.f32 %v575, %v619
      %621 = vmatmul.f32.gmra.mxu0 %v582
      %v622 = vpop.f32.mrf.mxu0
      %v623 = vadd.f32 %v575, %v622
      %624 = vmatmul.f32.gmra.mxu0 %v585
      %v625 = vpop.f32.mrf.mxu0
      %v626 = vadd.f32 %v575, %v625
      %627 = vmatmul.f32.gmra.mxu0 %v588
      %v628 = vpop.f32.mrf.mxu0
      %v629 = vadd.f32 %v575, %v628
      %630 = vmatmul.f32.gmra.mxu0 %v591
      %v631 = vpop.f32.mrf.mxu0
      %v632 = vadd.f32 %v575, %v631
      %633 = vmatmul.f32.gmra.mxu0 %v594
      %v634 = vpop.f32.mrf.mxu0
      %v635 = vadd.f32 %v575, %v634
      %636 = vmatmul.f32.gmra.mxu0 %v597
      %v637 = vpop.f32.mrf.mxu0
      %v638 = vadd.f32 %v575, %v637
      %639 = vmatmul.f32.gmra.mxu0 %v600
      %v640 = vpop.f32.mrf.mxu0
      %v641 = vadd.f32 %v575, %v640
      %642 = vdwg.mxu0
      %v643 = vxor.u32 %v620, 2147483648
      %v644 = vxor.u32 %v623, 2147483648
      %v645 = vxor.u32 %v626, 2147483648
      %v646 = vxor.u32 %v629, 2147483648
      %v647 = vxor.u32 %v632, 2147483648
      %v648 = vxor.u32 %v635, 2147483648
      %v649 = vxor.u32 %v638, 2147483648
      %v650 = vxor.u32 %v641, 2147483648
      %v651 = vmul.f32 %v643, 1.442695
      %v652 = vpow.pop %v651
      %v653 = vmul.f32 %v644, 1.442695
      %v654 = vpow.pop %v653
      %v655 = vmul.f32 %v645, 1.442695
      %v656 = vpow.pop %v655
      %v657 = vmul.f32 %v646, 1.442695
      %v658 = vpow.pop %v657
      %v659 = vmul.f32 %v647, 1.442695
      %v660 = vpow.pop %v659
      %v661 = vmul.f32 %v648, 1.442695
      %v662 = vpow.pop %v661
      %v663 = vmul.f32 %v649, 1.442695
      %v664 = vpow.pop %v663
      %v665 = vmul.f32 %v650, 1.442695
      %v666 = vpow.pop %v665
      %v667 = vadd.f32 %v652, 1.0
      %v668 = vadd.f32 %v654, 1.0
      %v669 = vadd.f32 %v656, 1.0
      %v670 = vadd.f32 %v658, 1.0
      %v671 = vadd.f32 %v660, 1.0
      %v672 = vadd.f32 %v662, 1.0
      %v673 = vadd.f32 %v664, 1.0
      %v674 = vadd.f32 %v666, 1.0
      %v675 = vrcp.pop %v667
      %v676 = vmul.f32 %v667, %v675
      %v677 = vsub.f32 1.0, %v676
      %v678 = vmul.f32 %v675, %v677
      %v679 = vadd.f32 %v675, %v678
      %vm680 = vweird.f32 %v667
      %vm681 = vweird.f32 %v675
      %vm682 = vmor %vm680, %vm681
      %v683 = vsel %vm682, %v675, %v679
      %v684 = vand.u32 2147483647, %v667
      %vm685 = vcmp.eq.f32.partialorder %v684, 8.507059e+37
      %v686 = vand.u32 %v667, 2147483648
      %v687 = vor.u32 1.1754944e-38, %v686
      %v688 = vsel %vm685, %v687, %v683
      %v689 = vmul.f32 1.0, %v688
      %v690 = vrcp.pop %v668
      %v691 = vmul.f32 %v668, %v690
      %v692 = vsub.f32 1.0, %v691
      %v693 = vmul.f32 %v690, %v692
      %v694 = vadd.f32 %v690, %v693
      %vm695 = vweird.f32 %v668
      %vm696 = vweird.f32 %v690
      %vm697 = vmor %vm695, %vm696
      %v698 = vsel %vm697, %v690, %v694
      %v699 = vand.u32 2147483647, %v668
      %vm700 = vcmp.eq.f32.partialorder %v699, 8.507059e+37
      %v701 = vand.u32 %v668, 2147483648
      %v702 = vor.u32 1.1754944e-38, %v701
      %v703 = vsel %vm700, %v702, %v698
      %v704 = vmul.f32 1.0, %v703
      %v705 = vrcp.pop %v669
      %v706 = vmul.f32 %v669, %v705
      %v707 = vsub.f32 1.0, %v706
      %v708 = vmul.f32 %v705, %v707
      %v709 = vadd.f32 %v705, %v708
      %vm710 = vweird.f32 %v669
      %vm711 = vweird.f32 %v705
      %vm712 = vmor %vm710, %vm711
      %v713 = vsel %vm712, %v705, %v709
      %v714 = vand.u32 2147483647, %v669
      %vm715 = vcmp.eq.f32.partialorder %v714, 8.507059e+37
      %v716 = vand.u32 %v669, 2147483648
      %v717 = vor.u32 1.1754944e-38, %v716
      %v718 = vsel %vm715, %v717, %v713
      %v719 = vmul.f32 1.0, %v718
      %v720 = vrcp.pop %v670
      %v721 = vmul.f32 %v670, %v720
      %v722 = vsub.f32 1.0, %v721
      %v723 = vmul.f32 %v720, %v722
      %v724 = vadd.f32 %v720, %v723
      %vm725 = vweird.f32 %v670
      %vm726 = vweird.f32 %v720
      %vm727 = vmor %vm725, %vm726
      %v728 = vsel %vm727, %v720, %v724
      %v729 = vand.u32 2147483647, %v670
      %vm730 = vcmp.eq.f32.partialorder %v729, 8.507059e+37
      %v731 = vand.u32 %v670, 2147483648
      %v732 = vor.u32 1.1754944e-38, %v731
      %v733 = vsel %vm730, %v732, %v728
      %v734 = vmul.f32 1.0, %v733
      %v735 = vrcp.pop %v671
      %v736 = vmul.f32 %v671, %v735
      %v737 = vsub.f32 1.0, %v736
      %v738 = vmul.f32 %v735, %v737
      %v739 = vadd.f32 %v735, %v738
      %vm740 = vweird.f32 %v671
      %vm741 = vweird.f32 %v735
      %vm742 = vmor %vm740, %vm741
      %v743 = vsel %vm742, %v735, %v739
      %v744 = vand.u32 2147483647, %v671
      %vm745 = vcmp.eq.f32.partialorder %v744, 8.507059e+37
      %v746 = vand.u32 %v671, 2147483648
      %v747 = vor.u32 1.1754944e-38, %v746
      %v748 = vsel %vm745, %v747, %v743
      %v749 = vmul.f32 1.0, %v748
      %v750 = vrcp.pop %v672
      %v751 = vmul.f32 %v672, %v750
      %v752 = vsub.f32 1.0, %v751
      %v753 = vmul.f32 %v750, %v752
      %v754 = vadd.f32 %v750, %v753
      %vm755 = vweird.f32 %v672
      %vm756 = vweird.f32 %v750
      %vm757 = vmor %vm755, %vm756
      %v758 = vsel %vm757, %v750, %v754
      %v759 = vand.u32 2147483647, %v672
      %vm760 = vcmp.eq.f32.partialorder %v759, 8.507059e+37
      %v761 = vand.u32 %v672, 2147483648
      %v762 = vor.u32 1.1754944e-38, %v761
      %v763 = vsel %vm760, %v762, %v758
      %v764 = vmul.f32 1.0, %v763
      %v765 = vrcp.pop %v673
      %v766 = vmul.f32 %v673, %v765
      %v767 = vsub.f32 1.0, %v766
      %v768 = vmul.f32 %v765, %v767
      %v769 = vadd.f32 %v765, %v768
      %vm770 = vweird.f32 %v673
      %vm771 = vweird.f32 %v765
      %vm772 = vmor %vm770, %vm771
      %v773 = vsel %vm772, %v765, %v769
      %v774 = vand.u32 2147483647, %v673
      %vm775 = vcmp.eq.f32.partialorder %v774, 8.507059e+37
      %v776 = vand.u32 %v673, 2147483648
      %v777 = vor.u32 1.1754944e-38, %v776
      %v778 = vsel %vm775, %v777, %v773
      %v779 = vmul.f32 1.0, %v778
      %v780 = vrcp.pop %v674
      %v781 = vmul.f32 %v674, %v780
      %v782 = vsub.f32 1.0, %v781
      %v783 = vmul.f32 %v780, %v782
      %v784 = vadd.f32 %v780, %v783
      %vm785 = vweird.f32 %v674
      %vm786 = vweird.f32 %v780
      %vm787 = vmor %vm785, %vm786
      %v788 = vsel %vm787, %v780, %v784
      %v789 = vand.u32 2147483647, %v674
      %vm790 = vcmp.eq.f32.partialorder %v789, 8.507059e+37
      %v791 = vand.u32 %v674, 2147483648
      %v792 = vor.u32 1.1754944e-38, %v791
      %v793 = vsel %vm790, %v792, %v788
      %v794 = vmul.f32 1.0, %v793
      %v795 = vtanh.pop %v620
      %v796 = vtanh.pop %v623
      %v797 = vtanh.pop %v626
      %v798 = vtanh.pop %v629
      %v799 = vtanh.pop %v632
      %v800 = vtanh.pop %v635
      %v801 = vtanh.pop %v638
      %v802 = vtanh.pop %v641
      %811 = vrot.lane.b32.xlu0 %v795, 64
      %v812 = vpop.permute.xlu0 %811
      %813 = vrot.lane.b32.xlu0 %v796, 64
      %v814 = vpop.permute.xlu0 %813
      %815 = vrot.lane.b32.xlu0 %v797, 64
      %v816 = vpop.permute.xlu0 %815
      %817 = vrot.lane.b32.xlu0 %v798, 64
      %v818 = vpop.permute.xlu0 %817
      %819 = vrot.lane.b32.xlu0 %v799, 64
      %v820 = vpop.permute.xlu0 %819
      %821 = vrot.lane.b32.xlu0 %v800, 64
      %v822 = vpop.permute.xlu0 %821
      %823 = vrot.lane.b32.xlu0 %v801, 64
      %v824 = vpop.permute.xlu0 %823
      %825 = vrot.lane.b32.xlu0 %v802, 64
      %v826 = vpop.permute.xlu0 %825
      %v835 = vmul.f32 %v689, %v812
      %v836 = vmul.f32 %v704, %v814
      %v837 = vmul.f32 %v719, %v816
      %v838 = vmul.f32 %v734, %v818
      %v839 = vmul.f32 %v749, %v820
      %v840 = vmul.f32 %v764, %v822
      %v841 = vmul.f32 %v779, %v824
      %v842 = vmul.f32 %v794, %v826
      %v843 = vtanh.pop %v835
      %v844 = vtanh.pop %v836
      %v845 = vtanh.pop %v837
      %v846 = vtanh.pop %v838
      %v847 = vtanh.pop %v839
      %v848 = vtanh.pop %v840
      %v849 = vtanh.pop %v841
      %v850 = vtanh.pop %v842
      %859 = vrot.lane.b32.xlu0 %v843, 96
      %v860 = vpop.permute.xlu0 %859
      %861 = vrot.lane.b32.xlu0 %v844, 96
      %v862 = vpop.permute.xlu0 %861
      %863 = vrot.lane.b32.xlu0 %v845, 96
      %v864 = vpop.permute.xlu0 %863
      %865 = vrot.lane.b32.xlu0 %v846, 96
      %v866 = vpop.permute.xlu0 %865
      %867 = vrot.lane.b32.xlu0 %v847, 96
      %v868 = vpop.permute.xlu0 %867
      %869 = vrot.lane.b32.xlu0 %v848, 96
      %v870 = vpop.permute.xlu0 %869
      %871 = vrot.lane.b32.xlu0 %v849, 96
      %v872 = vpop.permute.xlu0 %871
      %873 = vrot.lane.b32.xlu0 %v850, 96
      %v874 = vpop.permute.xlu0 %873
      %v883 = vmul.f32 %v689, %v860
      %v884 = vmul.f32 %v704, %v862
      %v885 = vmul.f32 %v719, %v864
      %v886 = vmul.f32 %v734, %v866
      %v887 = vmul.f32 %v749, %v868
      %v888 = vmul.f32 %v764, %v870
      %v889 = vmul.f32 %v779, %v872
      %v890 = vmul.f32 %v794, %v874
      %v891 = vld [vmem:[%s5] sm:$0xff]
      %v892 = vld [vmem:[%s5 + $0x8] sm:$0xff]
      %v893 = vld [vmem:[%s5 + $0x10] sm:$0xff]
      %v894 = vld [vmem:[%s5 + $0x18] sm:$0xff]
      %v895 = vld [vmem:[%s6] sm:$0x1]
      %v897 = vperm.slane %v895, 0
      %907 = vrot.lane.b32.xlu0 %v883, 32
      %v908 = vpop.permute.xlu0 %907
      %909 = vrot.lane.b32.xlu0 %v884, 32
      %v910 = vpop.permute.xlu0 %909
      %911 = vrot.lane.b32.xlu0 %v885, 32
      %v912 = vpop.permute.xlu0 %911
      %913 = vrot.lane.b32.xlu0 %v886, 32
      %v914 = vpop.permute.xlu0 %913
      %915 = vrot.lane.b32.xlu0 %v887, 32
      %v916 = vpop.permute.xlu0 %915
      %917 = vrot.lane.b32.xlu0 %v888, 32
      %v918 = vpop.permute.xlu0 %917
      %919 = vrot.lane.b32.xlu0 %v889, 32
      %v920 = vpop.permute.xlu0 %919
      %921 = vrot.lane.b32.xlu0 %v890, 32
      %v922 = vpop.permute.xlu0 %921
      %v923 = vsel %vm505, %v908, 0
      %v925 = vsel %vm505, %v910, 0
      %v927 = vsel %vm505, %v912, 0
      %v929 = vsel %vm505, %v914, 0
      %v931 = vsel %vm505, %v916, 0
      %v933 = vsel %vm505, %v918, 0
      %v935 = vsel %vm505, %v920, 0
      %v937 = vsel %vm505, %v922, 0
      %939 = vmatpush.msra.mxu0 0.0
      %940 = vmatpush.msra.mxu0 0.0
      %941 = vmatpush.msra.mxu0 0.0
      %942 = vmatpush.msra.mxu0 0.0
      %943 = vmatpush.msra.mxu0 0.0
      %944 = vmatpush.msra.mxu0 0.0
      %945 = vmatpush.msra.mxu0 0.0
      %946 = vmatpush.msra.mxu0 0.0
      %947 = vmatpush.msra.mxu0 0.0
      %948 = vmatpush.msra.mxu0 0.0
      %949 = vmatpush.msra.mxu0 0.0
      %950 = vmatpush.msra.mxu0 0.0
      %951 = vmatpush.msra.mxu0 %v894
      %952 = vmatpush.msra.mxu0 %v893
      %953 = vmatpush.msra.mxu0 %v892
      %954 = vmatpush.msra.mxu0 %v891
      %955 = vmatmul.f32.gmra.mxu0 %v923
      %v956 = vpop.f32.mrf.mxu0
      %v957 = vadd.f32 %v897, %v956
      %958 = vmatmul.f32.gmra.mxu0 %v925
      %v959 = vpop.f32.mrf.mxu0
      %v960 = vadd.f32 %v897, %v959
      %961 = vmatmul.f32.gmra.mxu0 %v927
      %v962 = vpop.f32.mrf.mxu0
      %v963 = vadd.f32 %v897, %v962
      %964 = vmatmul.f32.gmra.mxu0 %v929
      %v965 = vpop.f32.mrf.mxu0
      %v966 = vadd.f32 %v897, %v965
      %967 = vmatmul.f32.gmra.mxu0 %v931
      %v968 = vpop.f32.mrf.mxu0
      %v969 = vadd.f32 %v897, %v968
      %970 = vmatmul.f32.gmra.mxu0 %v933
      %v971 = vpop.f32.mrf.mxu0
      %v972 = vadd.f32 %v897, %v971
      %973 = vmatmul.f32.gmra.mxu0 %v935
      %v974 = vpop.f32.mrf.mxu0
      %v975 = vadd.f32 %v897, %v974
      %976 = vmatmul.f32.gmra.mxu0 %v937
      %v977 = vpop.f32.mrf.mxu0
      %v978 = vadd.f32 %v897, %v977
      %979 = vdwg.mxu0
      %v980 = vxor.u32 %v957, 2147483648
      %v981 = vxor.u32 %v960, 2147483648
      %v982 = vxor.u32 %v963, 2147483648
      %v983 = vxor.u32 %v966, 2147483648
      %v984 = vxor.u32 %v969, 2147483648
      %v985 = vxor.u32 %v972, 2147483648
      %v986 = vxor.u32 %v975, 2147483648
      %v987 = vxor.u32 %v978, 2147483648
      %v988 = vmul.f32 %v980, 1.442695
      %v989 = vpow.pop %v988
      %v990 = vmul.f32 %v981, 1.442695
      %v991 = vpow.pop %v990
      %v992 = vmul.f32 %v982, 1.442695
      %v993 = vpow.pop %v992
      %v994 = vmul.f32 %v983, 1.442695
      %v995 = vpow.pop %v994
      %v996 = vmul.f32 %v984, 1.442695
      %v997 = vpow.pop %v996
      %v998 = vmul.f32 %v985, 1.442695
      %v999 = vpow.pop %v998
      %v1000 = vmul.f32 %v986, 1.442695
      %v1001 = vpow.pop %v1000
      %v1002 = vmul.f32 %v987, 1.442695
      %v1003 = vpow.pop %v1002
      %v1004 = vadd.f32 %v989, 1.0
      %v1005 = vadd.f32 %v991, 1.0
      %v1006 = vadd.f32 %v993, 1.0
      %v1007 = vadd.f32 %v995, 1.0
      %v1008 = vadd.f32 %v997, 1.0
      %v1009 = vadd.f32 %v999, 1.0
      %v1010 = vadd.f32 %v1001, 1.0
      %v1011 = vadd.f32 %v1003, 1.0
      %v1012 = vrcp.pop %v1004
      %v1013 = vmul.f32 %v1004, %v1012
      %v1014 = vsub.f32 1.0, %v1013
      %v1015 = vmul.f32 %v1012, %v1014
      %v1016 = vadd.f32 %v1012, %v1015
      %vm1017 = vweird.f32 %v1004
      %vm1018 = vweird.f32 %v1012
      %vm1019 = vmor %vm1017, %vm1018
      %v1020 = vsel %vm1019, %v1012, %v1016
      %v1021 = vand.u32 2147483647, %v1004
      %vm1022 = vcmp.eq.f32.partialorder %v1021, 8.507059e+37
      %v1023 = vand.u32 %v1004, 2147483648
      %v1024 = vor.u32 1.1754944e-38, %v1023
      %v1025 = vsel %vm1022, %v1024, %v1020
      %v1026 = vmul.f32 1.0, %v1025
      %v1027 = vrcp.pop %v1005
      %v1028 = vmul.f32 %v1005, %v1027
      %v1029 = vsub.f32 1.0, %v1028
      %v1030 = vmul.f32 %v1027, %v1029
      %v1031 = vadd.f32 %v1027, %v1030
      %vm1032 = vweird.f32 %v1005
      %vm1033 = vweird.f32 %v1027
      %vm1034 = vmor %vm1032, %vm1033
      %v1035 = vsel %vm1034, %v1027, %v1031
      %v1036 = vand.u32 2147483647, %v1005
      %vm1037 = vcmp.eq.f32.partialorder %v1036, 8.507059e+37
      %v1038 = vand.u32 %v1005, 2147483648
      %v1039 = vor.u32 1.1754944e-38, %v1038
      %v1040 = vsel %vm1037, %v1039, %v1035
      %v1041 = vmul.f32 1.0, %v1040
      %v1042 = vrcp.pop %v1006
      %v1043 = vmul.f32 %v1006, %v1042
      %v1044 = vsub.f32 1.0, %v1043
      %v1045 = vmul.f32 %v1042, %v1044
      %v1046 = vadd.f32 %v1042, %v1045
      %vm1047 = vweird.f32 %v1006
      %vm1048 = vweird.f32 %v1042
      %vm1049 = vmor %vm1047, %vm1048
      %v1050 = vsel %vm1049, %v1042, %v1046
      %v1051 = vand.u32 2147483647, %v1006
      %vm1052 = vcmp.eq.f32.partialorder %v1051, 8.507059e+37
      %v1053 = vand.u32 %v1006, 2147483648
      %v1054 = vor.u32 1.1754944e-38, %v1053
      %v1055 = vsel %vm1052, %v1054, %v1050
      %v1056 = vmul.f32 1.0, %v1055
      %v1057 = vrcp.pop %v1007
      %v1058 = vmul.f32 %v1007, %v1057
      %v1059 = vsub.f32 1.0, %v1058
      %v1060 = vmul.f32 %v1057, %v1059
      %v1061 = vadd.f32 %v1057, %v1060
      %vm1062 = vweird.f32 %v1007
      %vm1063 = vweird.f32 %v1057
      %vm1064 = vmor %vm1062, %vm1063
      %v1065 = vsel %vm1064, %v1057, %v1061
      %v1066 = vand.u32 2147483647, %v1007
      %vm1067 = vcmp.eq.f32.partialorder %v1066, 8.507059e+37
      %v1068 = vand.u32 %v1007, 2147483648
      %v1069 = vor.u32 1.1754944e-38, %v1068
      %v1070 = vsel %vm1067, %v1069, %v1065
      %v1071 = vmul.f32 1.0, %v1070
      %v1072 = vrcp.pop %v1008
      %v1073 = vmul.f32 %v1008, %v1072
      %v1074 = vsub.f32 1.0, %v1073
      %v1075 = vmul.f32 %v1072, %v1074
      %v1076 = vadd.f32 %v1072, %v1075
      %vm1077 = vweird.f32 %v1008
      %vm1078 = vweird.f32 %v1072
      %vm1079 = vmor %vm1077, %vm1078
      %v1080 = vsel %vm1079, %v1072, %v1076
      %v1081 = vand.u32 2147483647, %v1008
      %vm1082 = vcmp.eq.f32.partialorder %v1081, 8.507059e+37
      %v1083 = vand.u32 %v1008, 2147483648
      %v1084 = vor.u32 1.1754944e-38, %v1083
      %v1085 = vsel %vm1082, %v1084, %v1080
      %v1086 = vmul.f32 1.0, %v1085
      %v1087 = vrcp.pop %v1009
      %v1088 = vmul.f32 %v1009, %v1087
      %v1089 = vsub.f32 1.0, %v1088
      %v1090 = vmul.f32 %v1087, %v1089
      %v1091 = vadd.f32 %v1087, %v1090
      %vm1092 = vweird.f32 %v1009
      %vm1093 = vweird.f32 %v1087
      %vm1094 = vmor %vm1092, %vm1093
      %v1095 = vsel %vm1094, %v1087, %v1091
      %v1096 = vand.u32 2147483647, %v1009
      %vm1097 = vcmp.eq.f32.partialorder %v1096, 8.507059e+37
      %v1098 = vand.u32 %v1009, 2147483648
      %v1099 = vor.u32 1.1754944e-38, %v1098
      %v1100 = vsel %vm1097, %v1099, %v1095
      %v1101 = vmul.f32 1.0, %v1100
      %v1102 = vrcp.pop %v1010
      %v1103 = vmul.f32 %v1010, %v1102
      %v1104 = vsub.f32 1.0, %v1103
      %v1105 = vmul.f32 %v1102, %v1104
      %v1106 = vadd.f32 %v1102, %v1105
      %vm1107 = vweird.f32 %v1010
      %vm1108 = vweird.f32 %v1102
      %vm1109 = vmor %vm1107, %vm1108
      %v1110 = vsel %vm1109, %v1102, %v1106
      %v1111 = vand.u32 2147483647, %v1010
      %vm1112 = vcmp.eq.f32.partialorder %v1111, 8.507059e+37
      %v1113 = vand.u32 %v1010, 2147483648
      %v1114 = vor.u32 1.1754944e-38, %v1113
      %v1115 = vsel %vm1112, %v1114, %v1110
      %v1116 = vmul.f32 1.0, %v1115
      %v1117 = vrcp.pop %v1011
      %v1118 = vmul.f32 %v1011, %v1117
      %v1119 = vsub.f32 1.0, %v1118
      %v1120 = vmul.f32 %v1117, %v1119
      %v1121 = vadd.f32 %v1117, %v1120
      %vm1122 = vweird.f32 %v1011
      %vm1123 = vweird.f32 %v1117
      %vm1124 = vmor %vm1122, %vm1123
      %v1125 = vsel %vm1124, %v1117, %v1121
      %v1126 = vand.u32 2147483647, %v1011
      %vm1127 = vcmp.eq.f32.partialorder %v1126, 8.507059e+37
      %v1128 = vand.u32 %v1011, 2147483648
      %v1129 = vor.u32 1.1754944e-38, %v1128
      %v1130 = vsel %vm1127, %v1129, %v1125
      %v1131 = vmul.f32 1.0, %v1130
      %v1132 = vtanh.pop %v957
      %v1133 = vtanh.pop %v960
      %v1134 = vtanh.pop %v963
      %v1135 = vtanh.pop %v966
      %v1136 = vtanh.pop %v969
      %v1137 = vtanh.pop %v972
      %v1138 = vtanh.pop %v975
      %v1139 = vtanh.pop %v978
      %1148 = vrot.lane.b32.xlu0 %v1132, 64
      %v1149 = vpop.permute.xlu0 %1148
      %1150 = vrot.lane.b32.xlu0 %v1133, 64
      %v1151 = vpop.permute.xlu0 %1150
      %1152 = vrot.lane.b32.xlu0 %v1134, 64
      %v1153 = vpop.permute.xlu0 %1152
      %1154 = vrot.lane.b32.xlu0 %v1135, 64
      %v1155 = vpop.permute.xlu0 %1154
      %1156 = vrot.lane.b32.xlu0 %v1136, 64
      %v1157 = vpop.permute.xlu0 %1156
      %1158 = vrot.lane.b32.xlu0 %v1137, 64
      %v1159 = vpop.permute.xlu0 %1158
      %1160 = vrot.lane.b32.xlu0 %v1138, 64
      %v1161 = vpop.permute.xlu0 %1160
      %1162 = vrot.lane.b32.xlu0 %v1139, 64
      %v1163 = vpop.permute.xlu0 %1162
      %v1172 = vmul.f32 %v1026, %v1149
      %v1173 = vmul.f32 %v1041, %v1151
      %v1174 = vmul.f32 %v1056, %v1153
      %v1175 = vmul.f32 %v1071, %v1155
      %v1176 = vmul.f32 %v1086, %v1157
      %v1177 = vmul.f32 %v1101, %v1159
      %v1178 = vmul.f32 %v1116, %v1161
      %v1179 = vmul.f32 %v1131, %v1163
      %v1180 = vtanh.pop %v1172
      %v1181 = vtanh.pop %v1173
      %v1182 = vtanh.pop %v1174
      %v1183 = vtanh.pop %v1175
      %v1184 = vtanh.pop %v1176
      %v1185 = vtanh.pop %v1177
      %v1186 = vtanh.pop %v1178
      %v1187 = vtanh.pop %v1179
      %1196 = vrot.lane.b32.xlu0 %v1180, 96
      %v1197 = vpop.permute.xlu0 %1196
      %1198 = vrot.lane.b32.xlu0 %v1181, 96
      %v1199 = vpop.permute.xlu0 %1198
      %1200 = vrot.lane.b32.xlu0 %v1182, 96
      %v1201 = vpop.permute.xlu0 %1200
      %1202 = vrot.lane.b32.xlu0 %v1183, 96
      %v1203 = vpop.permute.xlu0 %1202
      %1204 = vrot.lane.b32.xlu0 %v1184, 96
      %v1205 = vpop.permute.xlu0 %1204
      %1206 = vrot.lane.b32.xlu0 %v1185, 96
      %v1207 = vpop.permute.xlu0 %1206
      %1208 = vrot.lane.b32.xlu0 %v1186, 96
      %v1209 = vpop.permute.xlu0 %1208
      %1210 = vrot.lane.b32.xlu0 %v1187, 96
      %v1211 = vpop.permute.xlu0 %1210
      %v1220 = vmul.f32 %v1026, %v1197
      %v1221 = vmul.f32 %v1041, %v1199
      %v1222 = vmul.f32 %v1056, %v1201
      %v1223 = vmul.f32 %v1071, %v1203
      %v1224 = vmul.f32 %v1086, %v1205
      %v1225 = vmul.f32 %v1101, %v1207
      %v1226 = vmul.f32 %v1116, %v1209
      %v1227 = vmul.f32 %v1131, %v1211
      %v1228 = vld [vmem:[%s7] sm:$0xff]
      %v1229 = vld [vmem:[%s7 + $0x8] sm:$0xff]
      %v1230 = vld [vmem:[%s7 + $0x10] sm:$0xff]
      %v1231 = vld [vmem:[%s7 + $0x18] sm:$0xff]
      %v1232 = vld [vmem:[%s8] sm:$0x1]
      %v1234 = vperm.slane %v1232, 0
      %1244 = vrot.lane.b32.xlu0 %v1220, 32
      %v1245 = vpop.permute.xlu0 %1244
      %1246 = vrot.lane.b32.xlu0 %v1221, 32
      %v1247 = vpop.permute.xlu0 %1246
      %1248 = vrot.lane.b32.xlu0 %v1222, 32
      %v1249 = vpop.permute.xlu0 %1248
      %1250 = vrot.lane.b32.xlu0 %v1223, 32
      %v1251 = vpop.permute.xlu0 %1250
      %1252 = vrot.lane.b32.xlu0 %v1224, 32
      %v1253 = vpop.permute.xlu0 %1252
      %1254 = vrot.lane.b32.xlu0 %v1225, 32
      %v1255 = vpop.permute.xlu0 %1254
      %1256 = vrot.lane.b32.xlu0 %v1226, 32
      %v1257 = vpop.permute.xlu0 %1256
      %1258 = vrot.lane.b32.xlu0 %v1227, 32
      %v1259 = vpop.permute.xlu0 %1258
      %v1260 = vsel %vm505, %v1245, 0
      %v1262 = vsel %vm505, %v1247, 0
      %v1264 = vsel %vm505, %v1249, 0
      %v1266 = vsel %vm505, %v1251, 0
      %v1268 = vsel %vm505, %v1253, 0
      %v1270 = vsel %vm505, %v1255, 0
      %v1272 = vsel %vm505, %v1257, 0
      %v1274 = vsel %vm505, %v1259, 0
      %1276 = vmatpush.msra.mxu0 0.0
      %1277 = vmatpush.msra.mxu0 0.0
      %1278 = vmatpush.msra.mxu0 0.0
      %1279 = vmatpush.msra.mxu0 0.0
      %1280 = vmatpush.msra.mxu0 0.0
      %1281 = vmatpush.msra.mxu0 0.0
      %1282 = vmatpush.msra.mxu0 0.0
      %1283 = vmatpush.msra.mxu0 0.0
      %1284 = vmatpush.msra.mxu0 0.0
      %1285 = vmatpush.msra.mxu0 0.0
      %1286 = vmatpush.msra.mxu0 0.0
      %1287 = vmatpush.msra.mxu0 0.0
      %1288 = vmatpush.msra.mxu0 %v1231
      %1289 = vmatpush.msra.mxu0 %v1230
      %1290 = vmatpush.msra.mxu0 %v1229
      %1291 = vmatpush.msra.mxu0 %v1228
      %1292 = vmatmul.f32.gmra.mxu0 %v1260
      %v1293 = vpop.f32.mrf.mxu0
      %v1294 = vadd.f32 %v1234, %v1293
      %1295 = vmatmul.f32.gmra.mxu0 %v1262
      %v1296 = vpop.f32.mrf.mxu0
      %v1297 = vadd.f32 %v1234, %v1296
      %1298 = vmatmul.f32.gmra.mxu0 %v1264
      %v1299 = vpop.f32.mrf.mxu0
      %v1300 = vadd.f32 %v1234, %v1299
      %1301 = vmatmul.f32.gmra.mxu0 %v1266
      %v1302 = vpop.f32.mrf.mxu0
      %v1303 = vadd.f32 %v1234, %v1302
      %1304 = vmatmul.f32.gmra.mxu0 %v1268
      %v1305 = vpop.f32.mrf.mxu0
      %v1306 = vadd.f32 %v1234, %v1305
      %1307 = vmatmul.f32.gmra.mxu0 %v1270
      %v1308 = vpop.f32.mrf.mxu0
      %v1309 = vadd.f32 %v1234, %v1308
      %1310 = vmatmul.f32.gmra.mxu0 %v1272
      %v1311 = vpop.f32.mrf.mxu0
      %v1312 = vadd.f32 %v1234, %v1311
      %1313 = vmatmul.f32.gmra.mxu0 %v1274
      %v1314 = vpop.f32.mrf.mxu0
      %v1315 = vadd.f32 %v1234, %v1314
      %1316 = vdwg.mxu0
      %v1317 = vmax.f32 %v1294, 0.0
      %v1318 = vmax.f32 %v1297, 0.0
      %v1319 = vmax.f32 %v1300, 0.0
      %v1320 = vmax.f32 %v1303, 0.0
      %v1321 = vmax.f32 %v1306, 0.0
      %v1322 = vmax.f32 %v1309, 0.0
      %v1323 = vmax.f32 %v1312, 0.0
      %v1324 = vmax.f32 %v1315, 0.0
      %v1325 = vld [vmem:[%s9] sm:$0x1]
      %v1327 = vperm.slane %v1325, 0
      %v1329 = vmul.f32 %v1317, %v1327
      %v1330 = vmul.f32 %v1318, %v1327
      %v1331 = vmul.f32 %v1319, %v1327
      %v1332 = vmul.f32 %v1320, %v1327
      %v1333 = vmul.f32 %v1321, %v1327
      %v1334 = vmul.f32 %v1322, %v1327
      %v1335 = vmul.f32 %v1323, %v1327
      %v1336 = vmul.f32 %v1324, %v1327
      %vm1337 = vcmask 523264
      %v1338 = vsel %vm1337, %v1329, 0.0
      %1339 = vadd.xlane.f32.xlu0 %v1338
      %v1340 = vpop.xlane.xlu0 %1339
      %v1341 = vsel %vm1337, %v1330, 0.0
      %1342 = vadd.xlane.f32.xlu0 %v1341
      %v1343 = vpop.xlane.xlu0 %1342
      %v1344 = vsel %vm1337, %v1331, 0.0
      %1345 = vadd.xlane.f32.xlu0 %v1344
      %v1346 = vpop.xlane.xlu0 %1345
      %v1347 = vsel %vm1337, %v1332, 0.0
      %1348 = vadd.xlane.f32.xlu0 %v1347
      %v1349 = vpop.xlane.xlu0 %1348
      %v1350 = vsel %vm1337, %v1333, 0.0
      %1351 = vadd.xlane.f32.xlu0 %v1350
      %v1352 = vpop.xlane.xlu0 %1351
      %v1353 = vsel %vm1337, %v1334, 0.0
      %1354 = vadd.xlane.f32.xlu0 %v1353
      %v1355 = vpop.xlane.xlu0 %1354
      %v1356 = vsel %vm1337, %v1335, 0.0
      %1357 = vadd.xlane.f32.xlu0 %v1356
      %v1358 = vpop.xlane.xlu0 %1357
      %v1359 = vsel %vm1337, %v1336, 0.0
      %1360 = vadd.xlane.f32.xlu0 %v1359
      %v1361 = vpop.xlane.xlu0 %1360
      %v1362 = vld [vmem:[#allocation2] sm:$0x1]
      %v1364 = vperm.slane %v1362, 0
      %v1366 = vadd.f32 %v1340, %v1364
      %v1367 = vadd.f32 %v1343, %v1364
      %v1368 = vadd.f32 %v1346, %v1364
      %v1369 = vadd.f32 %v1349, %v1364
      %v1370 = vadd.f32 %v1352, %v1364
      %v1371 = vadd.f32 %v1355, %v1364
      %v1372 = vadd.f32 %v1358, %v1364
      %v1373 = vadd.f32 %v1361, %v1364
      %vm1374 = vcmask 7168
      %v1375 = vsel %vm1374, %v1366, -inf
      %v1376 = vsel %vm1374, %v1367, -inf
      %v1377 = vsel %vm1374, %v1368, -inf
      %v1378 = vsel %vm1374, %v1369, -inf
      %v1379 = vsel %vm1374, %v1370, -inf
      %v1380 = vmax.f32 %v1375, %v1379
      %v1381 = vsel %vm1374, %v1371, -inf
      %v1382 = vmax.f32 %v1376, %v1381
      %v1383 = vsel %vm1374, %v1372, -inf
      %v1384 = vmax.f32 %v1377, %v1383
      %v1385 = vsel %vm1374, %v1373, -inf
      %v1386 = vmax.f32 %v1378, %v1385
      %v1387 = vmax.f32 %v1380, %v1382
      %v1388 = vmax.f32 %v1384, %v1386
      %v1389 = vmax.f32 %v1387, %v1388
      %v1390 = vrot.slane %v1389, 4
      %v1391 = vmax.f32 %v1389, %v1390
      %v1392 = vrot.slane %v1391, 2
      %v1393 = vmax.f32 %v1391, %v1392
      %v1394 = vrot.slane %v1393, 1
      %v1395 = vmax.f32 %v1393, %v1394
      %v1396 = vsub.f32 %v1366, %v1395
      %v1397 = vsub.f32 %v1367, %v1395
      %v1398 = vsub.f32 %v1368, %v1395
      %v1399 = vsub.f32 %v1369, %v1395
      %v1400 = vsub.f32 %v1370, %v1395
      %v1401 = vsub.f32 %v1371, %v1395
      %v1402 = vsub.f32 %v1372, %v1395
      %v1403 = vsub.f32 %v1373, %v1395
      %v1404 = vmul.f32 %v1396, 1.442695
      %v1405 = vpow.pop %v1404
      %v1406 = vmul.f32 %v1397, 1.442695
      %v1407 = vpow.pop %v1406
      %v1408 = vmul.f32 %v1398, 1.442695
      %v1409 = vpow.pop %v1408
      %v1410 = vmul.f32 %v1399, 1.442695
      %v1411 = vpow.pop %v1410
      %v1412 = vmul.f32 %v1400, 1.442695
      %v1413 = vpow.pop %v1412
      %v1414 = vmul.f32 %v1401, 1.442695
      %v1415 = vpow.pop %v1414
      %v1416 = vmul.f32 %v1402, 1.442695
      %v1417 = vpow.pop %v1416
      %v1418 = vmul.f32 %v1403, 1.442695
      %v1419 = vpow.pop %v1418
      %v1420 = vld [vmem:[%s1] sm:$0xff]
      %v1422 = vsel %vm1337, %v1420, 0
      %1424 = vmatpush.msra.mxu0 0.0
      %1425 = vmatpush.msra.mxu0 0.0
      %1426 = vmatpush.msra.mxu0 0.0
      %1427 = vmatpush.msra.mxu0 0.0
      %1428 = vmatpush.msra.mxu0 0.0
      %1429 = vmatpush.msra.mxu0 0.0
      %1430 = vmatpush.msra.mxu0 0.0
      %1431 = vmatpush.msra.mxu0 0.0
      %1432 = vmatpush.msra.mxu0 %v1419
      %1433 = vmatpush.msra.mxu0 %v1417
      %1434 = vmatpush.msra.mxu0 %v1415
      %1435 = vmatpush.msra.mxu0 %v1413
      %1436 = vmatpush.msra.mxu0 %v1411
      %1437 = vmatpush.msra.mxu0 %v1409
      %1438 = vmatpush.msra.mxu0 %v1407
      %1439 = vmatpush.msra.mxu0 %v1405
      %1440 = vmatmul.f32.gmra.mxu0 %v1422
      %v1441 = vpop.f32.mrf.mxu0
      %v1442 = vadd.f32 0.0, %v1441
      %1443 = vdwg.mxu0
      %1445 = vset.pattern.permute.xlu0 0
      %1446 = vperm.xlu0 %1445, %v1405
      %v1447 = vpop.permute.xlu0 %1446
      %1450 = vset.pattern.permute.xlu0 0
      %1451 = vperm.xlu0 %1450, %v1407
      %v1452 = vpop.permute.xlu0 %1451
      %1455 = vset.pattern.permute.xlu0 0
      %1456 = vperm.xlu0 %1455, %v1409
      %v1457 = vpop.permute.xlu0 %1456
      %1460 = vset.pattern.permute.xlu0 0
      %1461 = vperm.xlu0 %1460, %v1411
      %v1462 = vpop.permute.xlu0 %1461
      %1465 = vset.pattern.permute.xlu0 0
      %1466 = vperm.xlu0 %1465, %v1413
      %v1467 = vpop.permute.xlu0 %1466
      %1470 = vset.pattern.permute.xlu0 0
      %1471 = vperm.xlu0 %1470, %v1415
      %v1472 = vpop.permute.xlu0 %1471
      %1475 = vset.pattern.permute.xlu0 0
      %1476 = vperm.xlu0 %1475, %v1417
      %v1477 = vpop.permute.xlu0 %1476
      %1480 = vset.pattern.permute.xlu0 0
      %1481 = vperm.xlu0 %1480, %v1419
      %v1482 = vpop.permute.xlu0 %1481
      %v1484 = vmul.f32 %v1220, %v1447
      %v1485 = vmul.f32 %v1221, %v1452
      %v1486 = vmul.f32 %v1222, %v1457
      %v1487 = vmul.f32 %v1223, %v1462
      %v1488 = vmul.f32 %v1224, %v1467
      %v1489 = vmul.f32 %v1225, %v1472
      %v1490 = vmul.f32 %v1226, %v1477
      %v1491 = vmul.f32 %v1227, %v1482
      %1500 = vrot.lane.b32.xlu0 %v1484, 32
      %v1501 = vpop.permute.xlu0 %1500
      %1502 = vrot.lane.b32.xlu0 %v1485, 32
      %v1503 = vpop.permute.xlu0 %1502
      %1504 = vrot.lane.b32.xlu0 %v1486, 32
      %v1505 = vpop.permute.xlu0 %1504
      %1506 = vrot.lane.b32.xlu0 %v1487, 32
      %v1507 = vpop.permute.xlu0 %1506
      %1508 = vrot.lane.b32.xlu0 %v1488, 32
      %v1509 = vpop.permute.xlu0 %1508
      %1510 = vrot.lane.b32.xlu0 %v1489, 32
      %v1511 = vpop.permute.xlu0 %1510
      %1512 = vrot.lane.b32.xlu0 %v1490, 32
      %v1513 = vpop.permute.xlu0 %1512
      %1514 = vrot.lane.b32.xlu0 %v1491, 32
      %v1515 = vpop.permute.xlu0 %1514
      %1524 = vmatpush.msra.mxu0 0.0
      %1525 = vmatpush.msra.mxu0 0.0
      %1526 = vmatpush.msra.mxu0 0.0
      %1527 = vmatpush.msra.mxu0 0.0
      %1528 = vmatpush.msra.mxu0 0.0
      %1529 = vmatpush.msra.mxu0 0.0
      %1530 = vmatpush.msra.mxu0 0.0
      %1531 = vmatpush.msra.mxu0 0.0
      %1532 = vmatpush.msra.mxu0 %v1515
      %1533 = vmatpush.msra.mxu0 %v1513
      %1534 = vmatpush.msra.mxu0 %v1511
      %1535 = vmatpush.msra.mxu0 %v1509
      %1536 = vmatpush.msra.mxu0 %v1507
      %1537 = vmatpush.msra.mxu0 %v1505
      %1538 = vmatpush.msra.mxu0 %v1503
      %1539 = vmatpush.msra.mxu0 %v1501
      %1540 = vmatmul.f32.gmra.mxu0 %v1422
      %v1541 = vpop.f32.mrf.mxu0
      %v1542 = vadd.f32 0.0, %v1541
      %1543 = vdwg.mxu0
      %1545 = vset.pattern.permute.xlu0 0
      %1546 = vperm.xlu0 %1545, %v1442
      %v1547 = vpop.permute.xlu0 %1546
      %v1549 = vrcp.pop %v1547
      %v1550 = vmul.f32 %v1547, %v1549
      %v1551 = vsub.f32 1.0, %v1550
      %v1552 = vmul.f32 %v1549, %v1551
      %v1553 = vadd.f32 %v1549, %v1552
      %vm1554 = vweird.f32 %v1547
      %vm1555 = vweird.f32 %v1549
      %vm1556 = vmor %vm1554, %vm1555
      %v1557 = vsel %vm1556, %v1549, %v1553
      %v1558 = vand.u32 2147483647, %v1547
      %vm1559 = vcmp.eq.f32.partialorder %v1558, 8.507059e+37
      %v1560 = vand.u32 %v1547, 2147483648
      %v1561 = vor.u32 1.1754944e-38, %v1560
      %v1562 = vsel %vm1559, %v1561, %v1557
      %v1563 = vmul.f32 %v1542, %v1562
      %v1564 = vld [vmem:[%s11] sm:$0xff]
      %v1565 = vld [vmem:[%s11 + $0x8] sm:$0xff]
      %v1566 = vld [vmem:[%s11 + $0x10] sm:$0xff]
      %v1567 = vld [vmem:[%s11 + $0x18] sm:$0xff]
      %v1568 = vld [vmem:[%s12] sm:$0x1]
      %v1570 = vperm.slane %v1568, 0
      %v1573 = vsel %vm505, %v1563, 0
      %1575 = vmatpush.msra.mxu0 0.0
      %1576 = vmatpush.msra.mxu0 0.0
      %1577 = vmatpush.msra.mxu0 0.0
      %1578 = vmatpush.msra.mxu0 0.0
      %1579 = vmatpush.msra.mxu0 0.0
      %1580 = vmatpush.msra.mxu0 0.0
      %1581 = vmatpush.msra.mxu0 0.0
      %1582 = vmatpush.msra.mxu0 0.0
      %1583 = vmatpush.msra.mxu0 0.0
      %1584 = vmatpush.msra.mxu0 0.0
      %1585 = vmatpush.msra.mxu0 0.0
      %1586 = vmatpush.msra.mxu0 0.0
      %1587 = vmatpush.msra.mxu0 %v1567
      %1588 = vmatpush.msra.mxu0 %v1566
      %1589 = vmatpush.msra.mxu0 %v1565
      %1590 = vmatpush.msra.mxu0 %v1564
      %1591 = vmatmul.f32.gmra.mxu0 %v1573
      %v1592 = vpop.f32.mrf.mxu0
      %v1593 = vadd.f32 %v1570, %v1592
      %1594 = vdwg.mxu0
      %vm1595 = vcmask 64512
      %1596 = vst.msk [vmem:[%s442] sm:$0xff] %vm1595, %v1593
      %p1597 = scmp.lt.s32.totalorder %s26, 1
      %s1598 = scalar_select %p1597, %s26, 1
      %s1599 = smul.addr %s1598, 8
      %s1600 = scalar_lea.vmem %s13, %s1599
      // Predicated region
      $region73: #{tpu_custom_call.1} parent=71 // pred_check
        %p1601 = pneg %p322
      $region74: #{tpu_custom_call.1} parent=71 // pred_check_branch
        %1603 = sbr.rel (%p1601) target = $region76
      $region75: #{tpu_custom_call.1} parent=71 // pred_region
        _
      $region76: #{tpu_custom_call.1} parent=71 // pred_fallthru
        _
    $region72: #{tpu_custom_call.1} parent=5 // pred_fallthru
      _
    %p1604 = scmp.le.s32.totalorder 2, %s21
    // Predicated region
    $region77: #{tpu_custom_call.1} parent=5 // pred_check
      %p1605 = pneg %p1604
    $region78: #{tpu_custom_call.1} parent=5 // pred_check_branch
      %1607 = sbr.rel (%p1605) target = $region80
    $region79: #{tpu_custom_call.1} parent=5 // pred_region
      %s1608 = ssub.s32 %s21, 2
      // Predicated region
      $region81: #{tpu_custom_call.1} parent=79 // pred_check
        %p1609 = pneg %p328
      $region82: #{tpu_custom_call.1} parent=79 // pred_check_branch
        %1611 = sbr.rel (%p1609) target = $region84
      $region83: #{tpu_custom_call.1} parent=79 // pred_region
        %p1612 = scmp.lt.s32.totalorder %s27, 1
        %s1613 = scalar_select %p1612, %s27, 1
        %s1614 = smul.addr %s1613, 8
        %s1615 = scalar_lea.vmem %s13, %s1614
      $region84: #{tpu_custom_call.1} parent=79 // pred_fallthru
        _
    $region80: #{tpu_custom_call.1} parent=5 // pred_fallthru
      _
  $region6: #{tpu_custom_call.1} parent=0 // loop_footer
    %s25 = sadd.s32 1, %s21
  $region7: #{tpu_custom_call.1} parent=0 // loop_footer_branch
    %20 = sbr.rel target = $region3
  $region8: #{tpu_custom_call.1} parent=0 // loop_exit
    _

</llo_original>
